<compile_context>
chip_gen: v5e
topology: v5e:2x2
jax: 0.10.0
libtpu: 0.0.40
codegen_flags: <defaults>
</compile_context>

<pallas_src>
import functools

import numpy as np
import jax
import jax.numpy as jnp
from jax import lax
from jax.experimental import pallas as pl
from jax.experimental.pallas import tpu as pltpu


def _round_up(x, m):
    return (x + m - 1) // m * m


_VMEM_LIMIT = 48 * 1024 * 1024   # explicit scoped-VMEM budget (fits v7x's 64 MiB)


# ----------------------------------------------------------------------------
# Shared in-kernel math
# ----------------------------------------------------------------------------
def _poly_cosine_block(q_blk, wq, demb_b, dn_b, same_t_mask, *, n_codes, hidden):
    """Poly-code projection + candidate-aware attention + cosine scores for one
    TQ-row block of queries.  Returns C (TQ, ND) f32.

    The (TQ, ND, H) context embeddings are never materialized:
        num[t,j]   = sum_m e[t,m,j] * <code[t,m], dn[j]>
        ||ctx||^2  = e^T G e  with the Gram computed as ONE dense masked matmul
                     over the flat (M*TQ, H) code matrix (row r = m*TQ + t),
    and the softmax normalization cancels in num/||ctx|| so unnormalized
    weights e = exp(s - max) are used directly.
    """
    tq = q_blk.shape[0]
    h = hidden
    m_codes = n_codes

    # (1) poly-code projection, fused into this kernel (no HBM round trip).
    codes_flat = jnp.dot(q_blk, wq, preferred_element_type=jnp.float32)       # (TQ, M*H)

    # (2) relayout to (M*TQ, H) via 128-aligned lane slices + sublane concat
    #     (row r = m*TQ + t); avoids a last-dim-splitting reshape.
    codes_cat = jnp.concatenate(
        [codes_flat[:, m * h:(m + 1) * h] for m in range(m_codes)], axis=0)   # (M*TQ, H) f32
    codes_cat_b = codes_cat.astype(jnp.bfloat16)

    # (3) attention scores + cosine numerator terms: two full-height MXU matmuls.
    s_cat = lax.dot_general(codes_cat_b, demb_b, (((1,), (1,)), ((), ())),
                            preferred_element_type=jnp.float32)               # (M*TQ, ND)
    cd_cat = lax.dot_general(codes_cat_b, dn_b, (((1,), (1,)), ((), ())),
                             preferred_element_type=jnp.float32)              # (M*TQ, ND)

    s_list = [s_cat[m * tq:(m + 1) * tq, :] for m in range(m_codes)]
    s_max = s_list[0]
    for m in range(1, m_codes):
        s_max = jnp.maximum(s_max, s_list[m])
    e_list = [jnp.exp(s - s_max) for s in s_list]        # unnormalized softmax weights

    num = e_list[0] * cd_cat[0:tq, :]
    for m in range(1, m_codes):
        num = num + e_list[m] * cd_cat[m * tq:(m + 1) * tq, :]

    # (4) ||ctx||^2 = e^T G e via ONE dense masked Gram matmul (f32, MXU)
    #     instead of TQ sliver-shaped (M, M) batched einsums.
    gram = lax.dot_general(codes_cat, codes_cat, (((1,), (1,)), ((), ())),
                           preferred_element_type=jnp.float32)                # (M*TQ, M*TQ)
    gram = gram * same_t_mask.astype(jnp.float32)        # keep only same-query pairs
    w_cat = jnp.concatenate(e_list, axis=0)                                   # (M*TQ, ND)
    gw = jnp.dot(gram, w_cat, preferred_element_type=jnp.float32)             # (M*TQ, ND)

    nsq = e_list[0] * gw[0:tq, :]
    for m in range(1, m_codes):
        nsq = nsq + e_list[m] * gw[m * tq:(m + 1) * tq, :]

    return num * lax.rsqrt(jnp.maximum(nsq, 1e-24))


def _ntxent_from_C(C, onehot, neg_mask, *, inv_temp, inv_n):
    """NT-Xent on the conditional cosine matrix C (NQp, ND).

    onehot[i, doc_pos[i]] = 1 (all-zero rows for padded anchors);
    neg_mask[i, i'] = 1 iff C[i', doc_pos[i]] is a valid negative for anchor i
    (host-precomputed; padded rows/columns already masked out).  Padded anchors
    contribute exactly 0; the mean uses the true anchor count via inv_n.
    """
    pos = jnp.sum(C * onehot, axis=-1, keepdims=True) * inv_temp              # (NQp, 1)
    # Ccols[i, i'] = C[i', doc_pos[i]]
    ccols = lax.dot_general(onehot, C, (((1,), (1,)), ((), ())),
                            preferred_element_type=jnp.float32)               # (NQp, NQp)
    neg = jnp.where(neg_mask > 0.5, ccols * inv_temp, -jnp.inf)
    mrow = jnp.maximum(pos, jnp.max(neg, axis=-1, keepdims=True))
    den = jnp.exp(pos - mrow) + jnp.sum(jnp.exp(neg - mrow), axis=-1, keepdims=True)
    per_pos = mrow - pos + jnp.log(den)                                       # (NQp, 1)
    return jnp.sum(per_pos) * inv_n


# ----------------------------------------------------------------------------
# Kernel bodies
# ----------------------------------------------------------------------------
def _encode_docs_kernel(d_ref, wd_ref, demb_ref, dembb_ref, dn_ref):
    d_emb = jnp.dot(d_ref[...], wd_ref[...], preferred_element_type=jnp.float32)
    demb_ref[...] = d_emb
    dembb_ref[...] = d_emb.astype(jnp.bfloat16)
    dn = d_emb * lax.rsqrt(
        jnp.maximum(jnp.sum(d_emb * d_emb, axis=-1, keepdims=True), 1e-24))
    dn_ref[...] = dn.astype(jnp.bfloat16)


def _fused_train_kernel(q_ref, d_ref, wq_ref, wd_ref, mask_ref, oh_ref, negm_ref,
                        loss_ref, *, n_codes, hidden, inv_temp, inv_n):
    # doc encoder (computed once -- single grid step)
    d_emb = jnp.dot(d_ref[...], wd_ref[...], preferred_element_type=jnp.float32)
    demb_b = d_emb.astype(jnp.bfloat16)
    dn_b = (d_emb * lax.rsqrt(jnp.maximum(
        jnp.sum(d_emb * d_emb, axis=-1, keepdims=True), 1e-24))).astype(jnp.bfloat16)
    C = _poly_cosine_block(q_ref[...], wq_ref[...], demb_b, dn_b, mask_ref[...],
                           n_codes=n_codes, hidden=hidden)
    loss_ref[0, 0] = _ntxent_from_C(C, oh_ref[...], negm_ref[...],
                                    inv_temp=inv_temp, inv_n=inv_n)


def _fused_scores_kernel(q_ref, wq_ref, dembb_ref, dn_ref, mask_ref, c_ref,
                         *, n_codes, hidden):
    c_ref[...] = _poly_cosine_block(q_ref[...], wq_ref[...], dembb_ref[...],
                                    dn_ref[...], mask_ref[...],
                                    n_codes=n_codes, hidden=hidden)


def _ntxent_kernel(c_ref, oh_ref, negm_ref, loss_ref, *, inv_temp, inv_n):
    loss_ref[0, 0] = _ntxent_from_C(c_ref[...], oh_ref[...], negm_ref[...],
                                    inv_temp=inv_temp, inv_n=inv_n)


def _project_kernel(x_ref, w_ref, o_ref):
    o_ref[...] = jnp.dot(x_ref[...], w_ref[...],
                         preferred_element_type=jnp.float32).astype(o_ref.dtype)


def _eval_scores_kernel(codes_ref, dembb_ref, dn_ref, c_ref, q_ref,
                        *, n_codes, hidden):
    # codes_ref: (TQ*M, H) bf16, row r = t*M + m  (flat, lane-dense layout)
    tqm = codes_ref.shape[0]
    tq = tqm // n_codes
    nd = dembb_ref.shape[0]
    codes_flat_b = codes_ref[...]
    s_flat = lax.dot_general(codes_flat_b, dembb_ref[...], (((1,), (1,)), ((), ())),
                             preferred_element_type=jnp.float32)              # (TQ*M, ND)
    scores = s_flat.reshape(tq, n_codes, nd)                                  # leading split
    w = jax.nn.softmax(scores, axis=1)                                        # (TQ, M, ND)
    codes3_f = codes_flat_b.astype(jnp.float32).reshape(tq, n_codes, hidden)
    # candidate-conditioned query embeddings via one batched contraction
    ctx = lax.dot_general(w, codes3_f, (((1,), (1,)), ((0,), (0,))),
                          preferred_element_type=jnp.float32)                 # (TQ, ND, H)
    dn_f = dn_ref[...].astype(jnp.float32)
    num = jnp.sum(ctx * dn_f[None, :, :], axis=-1)
    nsq = jnp.sum(ctx * ctx, axis=-1)
    c_ref[...] = num * lax.rsqrt(jnp.maximum(nsq, 1e-24))
    q_ref[...] = ctx


# ----------------------------------------------------------------------------
# pallas_call wrappers
# ----------------------------------------------------------------------------
def encode_docs(d_in, wd):
    nd, _ = d_in.shape
    h = wd.shape[1]
    return pl.pallas_call(
        _encode_docs_kernel,
        out_shape=(jax.ShapeDtypeStruct((nd, h), jnp.float32),
                   jax.ShapeDtypeStruct((nd, h), jnp.bfloat16),
                   jax.ShapeDtypeStruct((nd, h), jnp.bfloat16)),
        in_specs=[pl.BlockSpec(memory_space=pltpu.MemorySpace.VMEM)] * 2,
        out_specs=(pl.BlockSpec(memory_space=pltpu.MemorySpace.VMEM),) * 3,
    )(d_in, wd)


def fused_train_loss(q, d, wq, wd, same_t_mask, onehot, neg_mask,
                     *, n_codes, hidden, temperature, num_q):
    kern = functools.partial(_fused_train_kernel, n_codes=n_codes, hidden=hidden,
                             inv_temp=1.0 / temperature, inv_n=1.0 / num_q)
    out = pl.pallas_call(
        kern,
        out_shape=jax.ShapeDtypeStruct((1, 1), jnp.float32),
        in_specs=[pl.BlockSpec(memory_space=pltpu.MemorySpace.VMEM)] * 7,
        out_specs=pl.BlockSpec(memory_space=pltpu.MemorySpace.SMEM),
        compiler_params=pltpu.CompilerParams(vmem_limit_bytes=_VMEM_LIMIT),
    )(q, d, wq, wd, same_t_mask, onehot, neg_mask)
    return out[0, 0]


def fused_cosine_scores(q, wq, demb_b, dn_b, same_t_mask, *, tq, n_codes, hidden):
    nqp, k = q.shape
    mh = wq.shape[1]
    nd = demb_b.shape[0]
    mt = same_t_mask.shape[0]
    kern = functools.partial(_fused_scores_kernel, n_codes=n_codes, hidden=hidden)
    return pl.pallas_call(
        kern,
        out_shape=jax.ShapeDtypeStruct((nqp, nd), jnp.float32),
        grid_spec=pltpu.PrefetchScalarGridSpec(
            num_scalar_prefetch=0,
            grid=(nqp // tq,),
            in_specs=[pl.BlockSpec((tq, k), lambda i: (i, 0)),
                      pl.BlockSpec((k, mh), lambda i: (0, 0)),
                      pl.BlockSpec((nd, hidden), lambda i: (0, 0)),
                      pl.BlockSpec((nd, hidden), lambda i: (0, 0)),
                      pl.BlockSpec((mt, mt), lambda i: (0, 0))],
            out_specs=pl.BlockSpec((tq, nd), lambda i: (i, 0)),
        ),
        compiler_params=pltpu.CompilerParams(
            dimension_semantics=("parallel",),
            vmem_limit_bytes=_VMEM_LIMIT),
    )(q, wq, demb_b, dn_b, same_t_mask)


def ntxent_loss_from_C(C, onehot, neg_mask, *, temperature, num_q):
    kern = functools.partial(_ntxent_kernel, inv_temp=1.0 / temperature,
                             inv_n=1.0 / num_q)
    out = pl.pallas_call(
        kern,
        out_shape=jax.ShapeDtypeStruct((1, 1), jnp.float32),
        in_specs=[pl.BlockSpec(memory_space=pltpu.MemorySpace.VMEM)] * 3,
        out_specs=pl.BlockSpec(memory_space=pltpu.MemorySpace.SMEM),
    )(C, onehot, neg_mask)
    return out[0, 0]


def project_codes(x, w, *, tq):
    # bf16 output: the only downstream consumer immediately casts to bf16 anyway.
    n, k = x.shape
    mh = w.shape[1]
    return pl.pallas_call(
        _project_kernel,
        out_shape=jax.ShapeDtypeStruct((n, mh), jnp.bfloat16),
        grid_spec=pltpu.PrefetchScalarGridSpec(
            num_scalar_prefetch=0,
            grid=(n // tq,),
            in_specs=[pl.BlockSpec((tq, k), lambda i: (i, 0)),
                      pl.BlockSpec((k, mh), lambda i: (0, 0))],
            out_specs=pl.BlockSpec((tq, mh), lambda i: (i, 0)),
        ),
        compiler_params=pltpu.CompilerParams(dimension_semantics=("parallel",)),
    )(x, w)


def fused_cosine_scores_eval(codes_flat, demb_b, dn_b, *, tq, n_codes, hidden):
    # codes_flat: (nq_pad*M, H) bf16, row r = t*M + m
    nqm, h = codes_flat.shape
    nqp = nqm // n_codes
    nd = demb_b.shape[0]
    kern = functools.partial(_eval_scores_kernel, n_codes=n_codes, hidden=hidden)
    return pl.pallas_call(
        kern,
        out_shape=(jax.ShapeDtypeStruct((nqp, nd), jnp.float32),
                   jax.ShapeDtypeStruct((nqp, nd, h), jnp.float32)),
        grid_spec=pltpu.PrefetchScalarGridSpec(
            num_scalar_prefetch=0,
            grid=(nqp // tq,),
            in_specs=[pl.BlockSpec((tq * n_codes, h), lambda i: (i, 0)),
                      pl.BlockSpec((nd, h), lambda i: (0, 0)),
                      pl.BlockSpec((nd, h), lambda i: (0, 0))],
            out_specs=[pl.BlockSpec((tq, nd), lambda i: (i, 0)),
                       pl.BlockSpec((tq, nd, h), lambda i: (i, 0, 0))],
        ),
        compiler_params=pltpu.CompilerParams(
            dimension_semantics=("parallel",),
            vmem_limit_bytes=_VMEM_LIMIT),
    )(codes_flat, demb_b, dn_b)


# ----------------------------------------------------------------------------
# Wrapper reproducing PolyEncoderWrapper.forward
# ----------------------------------------------------------------------------
def get_indices_tuple(num_doc, num_pos):
    num_q = num_doc * num_pos
    doc_pos = np.repeat(np.arange(num_doc), num_pos)
    pos_id = doc_pos + np.arange(num_q) * num_doc
    neg_id = np.delete(np.arange(num_q * num_doc), pos_id)
    doc_neg = neg_id % num_doc
    return (doc_pos, pos_id, doc_neg, neg_id)


class PolyEncoderWrapperPallas:
    def __init__(self, batch_size, num_pos, in_dim, hidden, n_codes, weight_key):
        # layout constraints of this implementation (lane-aligned feature dims,
        # sublane-aligned poly-code count)
        assert in_dim % 128 == 0 and hidden % 128 == 0 and n_codes % 8 == 0
        self.num_doc = batch_size
        self.num_pos = num_pos
        self.num_q = batch_size * num_pos
        self.in_dim = in_dim
        self.hidden = hidden
        self.n_codes = n_codes
        self.temperature = 0.07
        self.training = True
        self.indices_tuple = get_indices_tuple(batch_size, num_pos)

        # query-row tile: as large as possible (fills MXU rows / fewer pipeline
        # bubbles) while keeping the (n_codes*tq)^2 masked Gram <= 4 MiB.
        tq_cap = max(8, min(128, (1024 // n_codes) // 8 * 8))
        self.tq = min(tq_cap, _round_up(self.num_q, 8))
        self.nq_pad = _round_up(self.num_q, self.tq)
        # single query tile -> whole training forward fuses into ONE pallas_call
        self.fully_fused = (self.nq_pad == self.tq)

        kd, kq = jax.random.split(weight_key)
        scale = 1.0 / np.sqrt(in_dim)
        # weights stored in bf16: MXU-native and half the HBM/VMEM traffic
        self.Wd = (jax.random.normal(kd, (in_dim, hidden), jnp.float32)
                   * scale).astype(jnp.bfloat16)
        self.Wq = (jax.random.normal(kq, (in_dim, n_codes * hidden), jnp.float32)
                   * scale).astype(jnp.bfloat16)
        # TODO(synk): tile Wq over its K / (M*H) axes when it no longer fits VMEM.

        doc_pos = self.indices_tuple[0]
        # positive one-hot (padded anchor rows are all-zero)
        oh = np.zeros((self.nq_pad, self.num_doc), np.float32)
        oh[np.arange(self.num_q), doc_pos] = 1.0
        # valid-negative mask, precomputed on the host (no oh @ oh^T in-kernel)
        negm = np.zeros((self.nq_pad, self.nq_pad), np.float32)
        negm[:self.num_q, :self.num_q] = (
            doc_pos[None, :] != doc_pos[:, None]).astype(np.float32)
        self.doc_pos_onehot = jnp.asarray(oh)
        self.neg_mask = jnp.asarray(negm)
        # block-diagonal (same-query) mask for the flat Gram of the cosine norm
        self.same_t_mask = jnp.asarray(
            np.kron(np.ones((n_codes, n_codes), np.float32),
                    np.eye(self.tq, dtype=np.float32))).astype(jnp.bfloat16)

    def __call__(self, inputs):
        q_inputs, d_inputs = inputs
        nq, h = self.num_q, self.hidden

        q = q_inputs.astype(jnp.bfloat16)
        d = d_inputs.astype(jnp.bfloat16)
        if self.nq_pad > nq:
            q = jnp.pad(q, ((0, self.nq_pad - nq), (0, 0)))

        if self.training:
            if self.fully_fused:
                # ONE pallas_call: doc encode + projection + attention + cosine
                # + NT-Xent.  q_embeds / codes / C never touch HBM.
                return fused_train_loss(
                    q, d, self.Wq, self.Wd, self.same_t_mask,
                    self.doc_pos_onehot, self.neg_mask,
                    n_codes=self.n_codes, hidden=h,
                    temperature=self.temperature, num_q=nq)
            # tiled path: docs encoded once, projection fused into the score kernel
            _, demb_b, dn_b = encode_docs(d, self.Wd)
            c_pad = fused_cosine_scores(q, self.Wq, demb_b, dn_b, self.same_t_mask,
                                        tq=self.tq, n_codes=self.n_codes, hidden=h)
            return ntxent_loss_from_C(c_pad, self.doc_pos_onehot, self.neg_mask,
                                      temperature=self.temperature, num_q=nq)

        # ---- eval path: also materialize q_embeds / d_embeds ----
        d_emb, demb_b, dn_b = encode_docs(d, self.Wd)
        codes = project_codes(q, self.Wq, tq=self.tq)            # (nq_pad, M*H) bf16
        codes_flat = codes.reshape(self.nq_pad * self.n_codes, h)  # free host bitcast
        c_pad, q_emb_pad = fused_cosine_scores_eval(
            codes_flat, demb_b, dn_b, tq=self.tq, n_codes=self.n_codes, hidden=h)
        loss = ntxent_loss_from_C(c_pad, self.doc_pos_onehot, self.neg_mask,
                                  temperature=self.temperature, num_q=nq)
        q_flat = q_emb_pad[:nq].reshape(-1, h)                   # q_embeds.reshape(-1, H)
        return loss, q_flat, d_emb


# ----------------------------------------------------------------------------
# Pure-JAX reference (mimics the kernel's bf16/f32 handling) for self-check
# ----------------------------------------------------------------------------
def _reference_loss(q_inputs, d_inputs, wq, wd, doc_pos, n_codes, hidden, temperature):
    nq = q_inputs.shape[0]
    qb = q_inputs.astype(jnp.bfloat16)
    db = d_inputs.astype(jnp.bfloat16)
    d_emb = jnp.dot(db, wd, preferred_element_type=jnp.float32)
    dn = d_emb / jnp.sqrt(jnp.maximum(jnp.sum(d_emb * d_emb, -1, keepdims=True), 1e-24))
    codes = jnp.dot(qb, wq, preferred_element_type=jnp.float32).reshape(nq, n_codes, hidden)
    codes_b = codes.astype(jnp.bfloat16)
    s = jnp.einsum('qmh,dh->qmd', codes_b, d_emb.astype(jnp.bfloat16),
                   preferred_element_type=jnp.float32)
    w = jax.nn.softmax(s, axis=1)
    cd = jnp.einsum('qmh,dh->qmd', codes_b, dn.astype(jnp.bfloat16),
                    preferred_element_type=jnp.float32)
    num = jnp.sum(w * cd, axis=1)
    ctx = jnp.einsum('qmd,qmh->qdh', w, codes)
    nsq = jnp.sum(ctx * ctx, axis=-1)
    C = num / jnp.sqrt(jnp.maximum(nsq, 1e-24))
    dp = jnp.asarray(doc_pos)
    pos = C[jnp.arange(nq), dp] / temperature
    colC = C[:, dp].T / temperature                    # colC[i, i'] = C[i', dp[i]] / T
    valid = dp[None, :] != dp[:, None]
    neg = jnp.where(valid, colC, -jnp.inf)
    m = jnp.maximum(pos, jnp.max(neg, axis=-1))
    den = jnp.exp(pos - m) + jnp.sum(jnp.exp(neg - m), axis=-1)
    return jnp.mean(m - pos + jnp.log(den))


if __name__ == "__main__":
    key = jax.random.PRNGKey(0)

    # -------- config 1: tiny demo shapes -> single fully-fused training call --------
    batch_size, num_pos, in_dim, hidden, n_codes = 8, 1, 128, 128, 8
    num_q = batch_size * num_pos
    k_q, k_d, k_w, k_rest = jax.random.split(key, 4)
    q_inputs = jax.random.normal(k_q, (num_q, in_dim), jnp.float32)
    d_inputs = jax.random.normal(k_d, (batch_size, in_dim), jnp.float32)

    model = PolyEncoderWrapperPallas(batch_size, num_pos, in_dim, hidden,
                                     n_codes, weight_key=k_w)
    assert model.fully_fused

    model.training = True
    loss = jax.block_until_ready(model((q_inputs, d_inputs)))
    ref = jax.block_until_ready(_reference_loss(
        q_inputs, d_inputs, model.Wq, model.Wd, model.indices_tuple[0],
        n_codes, hidden, model.temperature))
    assert jnp.isfinite(loss), "loss is not finite"
    assert abs(float(loss) - float(ref)) < 0.1 + 0.01 * abs(float(ref)), \
        (float(loss), float(ref))

    model.training = False
    loss2, q_emb, d_emb = model((q_inputs, d_inputs))
    jax.block_until_ready((loss2, q_emb, d_emb))
    assert q_emb.shape == (num_q * batch_size, hidden)
    assert d_emb.shape == (batch_size, hidden)
    assert jnp.isfinite(loss2)

    # -------- config 2: enough queries to exercise the tiled multi-step path --------
    batch_size2, num_pos2 = 16, 16          # num_q = 256 > tq cap (128) -> 2 grid steps
    num_q2 = batch_size2 * num_pos2
    kq2, kd2, kw2 = jax.random.split(k_rest, 3)
    q2 = jax.random.normal(kq2, (num_q2, in_dim), jnp.float32)
    d2 = jax.random.normal(kd2, (batch_size2, in_dim), jnp.float32)
    model2 = PolyEncoderWrapperPallas(batch_size2, num_pos2, in_dim, hidden,
                                      n_codes, weight_key=kw2)
    assert not model2.fully_fused

    model2.training = True
    loss3 = jax.block_until_ready(model2((q2, d2)))
    ref3 = jax.block_until_ready(_reference_loss(
        q2, d2, model2.Wq, model2.Wd, model2.indices_tuple[0],
        n_codes, hidden, model2.temperature))
    assert jnp.isfinite(loss3)
    assert abs(float(loss3) - float(ref3)) < 0.1 + 0.01 * abs(float(ref3)), \
        (float(loss3), float(ref3))

    model2.training = False
    loss4, q_emb2, d_emb2 = model2((q2, d2))
    jax.block_until_ready((loss4, q_emb2, d_emb2))
    assert q_emb2.shape == (num_q2 * batch_size2, hidden)
    assert d_emb2.shape == (batch_size2, hidden)
    assert jnp.isfinite(loss4)

    print("KERNEL_OK")
</pallas_src>

<mosaic_0001>
module attributes {stable_mosaic.version = 11 : i64} {
  func.func @_fused_train_kernel(%arg0: memref<8x128xbf16, #tpu.memory_space<vmem>>, %arg1: memref<8x128xbf16, #tpu.memory_space<vmem>>, %arg2: memref<128x1024xbf16, #tpu.memory_space<vmem>>, %arg3: memref<128x128xbf16, #tpu.memory_space<vmem>>, %arg4: memref<64x64xbf16, #tpu.memory_space<vmem>>, %arg5: memref<8x8xf32, #tpu.memory_space<vmem>>, %arg6: memref<8x8xf32, #tpu.memory_space<vmem>>, %arg7: memref<1x1xf32, #tpu.memory_space<smem>>) attributes {dimension_semantics = [], scalar_prefetch = 0 : i64, scratch_operands = 0 : i64, tpu.core_type = #tpu.core_type<tc>} {
    %c0 = arith.constant 0 : index
    %c0_0 = arith.constant 0 : index
    %0 = vector.load %arg1[%c0, %c0_0] : memref<8x128xbf16, #tpu.memory_space<vmem>>, vector<8x128xbf16>
    %c0_1 = arith.constant 0 : index
    %c0_2 = arith.constant 0 : index
    %1 = vector.load %arg3[%c0_1, %c0_2] : memref<128x128xbf16, #tpu.memory_space<vmem>>, vector<128x128xbf16>
    %cst = arith.constant dense<0.000000e+00> : vector<8x128xf32>
    %2 = tpu.matmul %0, %1, %cst {dimension_numbers = #tpu.dot_dimension_numbers<[1], [0], [0], [1], [0, 0, 1, 1], [], []>} : vector<8x128xbf16>, vector<128x128xbf16>, vector<8x128xf32> -> vector<8x128xf32>
    %3 = arith.truncf %2 : vector<8x128xf32> to vector<8x128xbf16>
    %4 = arith.mulf %2, %2 : vector<8x128xf32>
    %cst_3 = arith.constant dense<0.000000e+00> : vector<8xf32>
    %5 = vector.multi_reduction <add>, %4, %cst_3 [1] : vector<8x128xf32> to vector<8xf32>
    %6 = vector.shape_cast %5 : vector<8xf32> to vector<8x1xf32>
    %cst_4 = arith.constant 1.000000e-24 : f32
    %7 = vector.broadcast %cst_4 : f32 to vector<8x1xf32>
    %8 = arith.maximumf %6, %7 : vector<8x1xf32>
    %9 = math.rsqrt %8 : vector<8x1xf32>
    %10 = vector.broadcast %9 : vector<8x1xf32> to vector<8x128xf32>
    %11 = arith.mulf %2, %10 : vector<8x128xf32>
    %12 = arith.truncf %11 : vector<8x128xf32> to vector<8x128xbf16>
    %c0_5 = arith.constant 0 : index
    %c0_6 = arith.constant 0 : index
    %13 = vector.load %arg0[%c0_5, %c0_6] : memref<8x128xbf16, #tpu.memory_space<vmem>>, vector<8x128xbf16>
    %c0_7 = arith.constant 0 : index
    %c0_8 = arith.constant 0 : index
    %14 = vector.load %arg2[%c0_7, %c0_8] : memref<128x1024xbf16, #tpu.memory_space<vmem>>, vector<128x1024xbf16>
    %c0_9 = arith.constant 0 : index
    %c0_10 = arith.constant 0 : index
    %15 = vector.load %arg4[%c0_9, %c0_10] : memref<64x64xbf16, #tpu.memory_space<vmem>>, vector<64x64xbf16>
    %cst_11 = arith.constant dense<0.000000e+00> : vector<8x1024xf32>
    %16 = tpu.matmul %13, %14, %cst_11 {dimension_numbers = #tpu.dot_dimension_numbers<[1], [0], [0], [1], [0, 0, 1, 1], [], []>} : vector<8x128xbf16>, vector<128x1024xbf16>, vector<8x1024xf32> -> vector<8x1024xf32>
    %17 = vector.extract_strided_slice %16 {offsets = [0, 0], sizes = [8, 128], strides = [1, 1]} : vector<8x1024xf32> to vector<8x128xf32>
    %18 = vector.extract_strided_slice %16 {offsets = [0, 128], sizes = [8, 128], strides = [1, 1]} : vector<8x1024xf32> to vector<8x128xf32>
    %19 = vector.extract_strided_slice %16 {offsets = [0, 256], sizes = [8, 128], strides = [1, 1]} : vector<8x1024xf32> to vector<8x128xf32>
    %20 = vector.extract_strided_slice %16 {offsets = [0, 384], sizes = [8, 128], strides = [1, 1]} : vector<8x1024xf32> to vector<8x128xf32>
    %21 = vector.extract_strided_slice %16 {offsets = [0, 512], sizes = [8, 128], strides = [1, 1]} : vector<8x1024xf32> to vector<8x128xf32>
    %22 = vector.extract_strided_slice %16 {offsets = [0, 640], sizes = [8, 128], strides = [1, 1]} : vector<8x1024xf32> to vector<8x128xf32>
    %23 = vector.extract_strided_slice %16 {offsets = [0, 768], sizes = [8, 128], strides = [1, 1]} : vector<8x1024xf32> to vector<8x128xf32>
    %24 = vector.extract_strided_slice %16 {offsets = [0, 896], sizes = [8, 128], strides = [1, 1]} : vector<8x1024xf32> to vector<8x128xf32>
    %25 = tpu.concatenate %17, %18, %19, %20, %21, %22, %23, %24 in 0 : vector<8x128xf32>, vector<8x128xf32>, vector<8x128xf32>, vector<8x128xf32>, vector<8x128xf32>, vector<8x128xf32>, vector<8x128xf32>, vector<8x128xf32> -> vector<64x128xf32>
    %26 = arith.truncf %25 : vector<64x128xf32> to vector<64x128xbf16>
    %cst_12 = arith.constant dense<0.000000e+00> : vector<64x8xf32>
    %27 = tpu.matmul %26, %3, %cst_12 {dimension_numbers = #tpu.dot_dimension_numbers<[1], [1], [0], [0], [0, 0, 1, 0], [], []>} : vector<64x128xbf16>, vector<8x128xbf16>, vector<64x8xf32> -> vector<64x8xf32>
    %cst_13 = arith.constant dense<0.000000e+00> : vector<64x8xf32>
    %28 = tpu.matmul %26, %12, %cst_13 {dimension_numbers = #tpu.dot_dimension_numbers<[1], [1], [0], [0], [0, 0, 1, 0], [], []>} : vector<64x128xbf16>, vector<8x128xbf16>, vector<64x8xf32> -> vector<64x8xf32>
    %29 = vector.extract_strided_slice %27 {offsets = [0, 0], sizes = [8, 8], strides = [1, 1]} : vector<64x8xf32> to vector<8x8xf32>
    %30 = vector.extract_strided_slice %27 {offsets = [8, 0], sizes = [8, 8], strides = [1, 1]} : vector<64x8xf32> to vector<8x8xf32>
    %31 = vector.extract_strided_slice %27 {offsets = [16, 0], sizes = [8, 8], strides = [1, 1]} : vector<64x8xf32> to vector<8x8xf32>
    %32 = vector.extract_strided_slice %27 {offsets = [24, 0], sizes = [8, 8], strides = [1, 1]} : vector<64x8xf32> to vector<8x8xf32>
    %33 = vector.extract_strided_slice %27 {offsets = [32, 0], sizes = [8, 8], strides = [1, 1]} : vector<64x8xf32> to vector<8x8xf32>
    %34 = vector.extract_strided_slice %27 {offsets = [40, 0], sizes = [8, 8], strides = [1, 1]} : vector<64x8xf32> to vector<8x8xf32>
    %35 = vector.extract_strided_slice %27 {offsets = [48, 0], sizes = [8, 8], strides = [1, 1]} : vector<64x8xf32> to vector<8x8xf32>
    %36 = vector.extract_strided_slice %27 {offsets = [56, 0], sizes = [8, 8], strides = [1, 1]} : vector<64x8xf32> to vector<8x8xf32>
    %37 = arith.maximumf %29, %30 : vector<8x8xf32>
    %38 = arith.maximumf %37, %31 : vector<8x8xf32>
    %39 = arith.maximumf %38, %32 : vector<8x8xf32>
    %40 = arith.maximumf %39, %33 : vector<8x8xf32>
    %41 = arith.maximumf %40, %34 : vector<8x8xf32>
    %42 = arith.maximumf %41, %35 : vector<8x8xf32>
    %43 = arith.maximumf %42, %36 : vector<8x8xf32>
    %44 = arith.subf %29, %43 : vector<8x8xf32>
    %45 = math.exp %44 : vector<8x8xf32>
    %46 = arith.subf %30, %43 : vector<8x8xf32>
    %47 = math.exp %46 : vector<8x8xf32>
    %48 = arith.subf %31, %43 : vector<8x8xf32>
    %49 = math.exp %48 : vector<8x8xf32>
    %50 = arith.subf %32, %43 : vector<8x8xf32>
    %51 = math.exp %50 : vector<8x8xf32>
    %52 = arith.subf %33, %43 : vector<8x8xf32>
    %53 = math.exp %52 : vector<8x8xf32>
    %54 = arith.subf %34, %43 : vector<8x8xf32>
    %55 = math.exp %54 : vector<8x8xf32>
    %56 = arith.subf %35, %43 : vector<8x8xf32>
    %57 = math.exp %56 : vector<8x8xf32>
    %58 = arith.subf %36, %43 : vector<8x8xf32>
    %59 = math.exp %58 : vector<8x8xf32>
    %60 = vector.extract_strided_slice %28 {offsets = [0, 0], sizes = [8, 8], strides = [1, 1]} : vector<64x8xf32> to vector<8x8xf32>
    %61 = arith.mulf %45, %60 : vector<8x8xf32>
    %62 = vector.extract_strided_slice %28 {offsets = [8, 0], sizes = [8, 8], strides = [1, 1]} : vector<64x8xf32> to vector<8x8xf32>
    %63 = arith.mulf %47, %62 : vector<8x8xf32>
    %64 = arith.addf %61, %63 : vector<8x8xf32>
    %65 = vector.extract_strided_slice %28 {offsets = [16, 0], sizes = [8, 8], strides = [1, 1]} : vector<64x8xf32> to vector<8x8xf32>
    %66 = arith.mulf %49, %65 : vector<8x8xf32>
    %67 = arith.addf %64, %66 : vector<8x8xf32>
    %68 = vector.extract_strided_slice %28 {offsets = [24, 0], sizes = [8, 8], strides = [1, 1]} : vector<64x8xf32> to vector<8x8xf32>
    %69 = arith.mulf %51, %68 : vector<8x8xf32>
    %70 = arith.addf %67, %69 : vector<8x8xf32>
    %71 = vector.extract_strided_slice %28 {offsets = [32, 0], sizes = [8, 8], strides = [1, 1]} : vector<64x8xf32> to vector<8x8xf32>
    %72 = arith.mulf %53, %71 : vector<8x8xf32>
    %73 = arith.addf %70, %72 : vector<8x8xf32>
    %74 = vector.extract_strided_slice %28 {offsets = [40, 0], sizes = [8, 8], strides = [1, 1]} : vector<64x8xf32> to vector<8x8xf32>
    %75 = arith.mulf %55, %74 : vector<8x8xf32>
    %76 = arith.addf %73, %75 : vector<8x8xf32>
    %77 = vector.extract_strided_slice %28 {offsets = [48, 0], sizes = [8, 8], strides = [1, 1]} : vector<64x8xf32> to vector<8x8xf32>
    %78 = arith.mulf %57, %77 : vector<8x8xf32>
    %79 = arith.addf %76, %78 : vector<8x8xf32>
    %80 = vector.extract_strided_slice %28 {offsets = [56, 0], sizes = [8, 8], strides = [1, 1]} : vector<64x8xf32> to vector<8x8xf32>
    %81 = arith.mulf %59, %80 : vector<8x8xf32>
    %82 = arith.addf %79, %81 : vector<8x8xf32>
    %cst_14 = arith.constant dense<0.000000e+00> : vector<64x64xf32>
    %83 = tpu.matmul %25, %25, %cst_14 {dimension_numbers = #tpu.dot_dimension_numbers<[1], [1], [0], [0], [0, 0, 1, 0], [], []>} : vector<64x128xf32>, vector<64x128xf32>, vector<64x64xf32> -> vector<64x64xf32>
    %84 = arith.extf %15 : vector<64x64xbf16> to vector<64x64xf32>
    %85 = arith.mulf %83, %84 : vector<64x64xf32>
    %86 = tpu.concatenate %45, %47, %49, %51, %53, %55, %57, %59 in 0 : vector<8x8xf32>, vector<8x8xf32>, vector<8x8xf32>, vector<8x8xf32>, vector<8x8xf32>, vector<8x8xf32>, vector<8x8xf32>, vector<8x8xf32> -> vector<64x8xf32>
    %cst_15 = arith.constant dense<0.000000e+00> : vector<64x8xf32>
    %87 = tpu.matmul %85, %86, %cst_15 {dimension_numbers = #tpu.dot_dimension_numbers<[1], [0], [0], [1], [0, 0, 1, 1], [], []>} : vector<64x64xf32>, vector<64x8xf32>, vector<64x8xf32> -> vector<64x8xf32>
    %88 = vector.extract_strided_slice %87 {offsets = [0, 0], sizes = [8, 8], strides = [1, 1]} : vector<64x8xf32> to vector<8x8xf32>
    %89 = arith.mulf %45, %88 : vector<8x8xf32>
    %90 = vector.extract_strided_slice %87 {offsets = [8, 0], sizes = [8, 8], strides = [1, 1]} : vector<64x8xf32> to vector<8x8xf32>
    %91 = arith.mulf %47, %90 : vector<8x8xf32>
    %92 = arith.addf %89, %91 : vector<8x8xf32>
    %93 = vector.extract_strided_slice %87 {offsets = [16, 0], sizes = [8, 8], strides = [1, 1]} : vector<64x8xf32> to vector<8x8xf32>
    %94 = arith.mulf %49, %93 : vector<8x8xf32>
    %95 = arith.addf %92, %94 : vector<8x8xf32>
    %96 = vector.extract_strided_slice %87 {offsets = [24, 0], sizes = [8, 8], strides = [1, 1]} : vector<64x8xf32> to vector<8x8xf32>
    %97 = arith.mulf %51, %96 : vector<8x8xf32>
    %98 = arith.addf %95, %97 : vector<8x8xf32>
    %99 = vector.extract_strided_slice %87 {offsets = [32, 0], sizes = [8, 8], strides = [1, 1]} : vector<64x8xf32> to vector<8x8xf32>
    %100 = arith.mulf %53, %99 : vector<8x8xf32>
    %101 = arith.addf %98, %100 : vector<8x8xf32>
    %102 = vector.extract_strided_slice %87 {offsets = [40, 0], sizes = [8, 8], strides = [1, 1]} : vector<64x8xf32> to vector<8x8xf32>
    %103 = arith.mulf %55, %102 : vector<8x8xf32>
    %104 = arith.addf %101, %103 : vector<8x8xf32>
    %105 = vector.extract_strided_slice %87 {offsets = [48, 0], sizes = [8, 8], strides = [1, 1]} : vector<64x8xf32> to vector<8x8xf32>
    %106 = arith.mulf %57, %105 : vector<8x8xf32>
    %107 = arith.addf %104, %106 : vector<8x8xf32>
    %108 = vector.extract_strided_slice %87 {offsets = [56, 0], sizes = [8, 8], strides = [1, 1]} : vector<64x8xf32> to vector<8x8xf32>
    %109 = arith.mulf %59, %108 : vector<8x8xf32>
    %110 = arith.addf %107, %109 : vector<8x8xf32>
    %cst_16 = arith.constant 1.000000e-24 : f32
    %111 = vector.broadcast %cst_16 : f32 to vector<8x8xf32>
    %112 = arith.maximumf %110, %111 : vector<8x8xf32>
    %113 = math.rsqrt %112 : vector<8x8xf32>
    %114 = arith.mulf %82, %113 : vector<8x8xf32>
    %c0_17 = arith.constant 0 : index
    %c0_18 = arith.constant 0 : index
    %115 = vector.load %arg5[%c0_17, %c0_18] : memref<8x8xf32, #tpu.memory_space<vmem>>, vector<8x8xf32>
    %c0_19 = arith.constant 0 : index
    %c0_20 = arith.constant 0 : index
    %116 = vector.load %arg6[%c0_19, %c0_20] : memref<8x8xf32, #tpu.memory_space<vmem>>, vector<8x8xf32>
    %117 = arith.mulf %114, %115 : vector<8x8xf32>
    %cst_21 = arith.constant dense<0.000000e+00> : vector<8xf32>
    %118 = vector.multi_reduction <add>, %117, %cst_21 [1] : vector<8x8xf32> to vector<8xf32>
    %119 = vector.shape_cast %118 : vector<8xf32> to vector<8x1xf32>
    %cst_22 = arith.constant 14.2857141 : f32
    %120 = vector.broadcast %cst_22 : f32 to vector<8x1xf32>
    %121 = arith.mulf %119, %120 : vector<8x1xf32>
    %cst_23 = arith.constant dense<0.000000e+00> : vector<8x8xf32>
    %122 = tpu.matmul %115, %114, %cst_23 {dimension_numbers = #tpu.dot_dimension_numbers<[1], [1], [0], [0], [0, 0, 1, 0], [], []>} : vector<8x8xf32>, vector<8x8xf32>, vector<8x8xf32> -> vector<8x8xf32>
    %cst_24 = arith.constant 5.000000e-01 : f32
    %123 = vector.broadcast %cst_24 : f32 to vector<8x8xf32>
    %124 = arith.cmpf ogt, %116, %123 : vector<8x8xf32>
    %cst_25 = arith.constant 14.2857141 : f32
    %125 = vector.broadcast %cst_25 : f32 to vector<8x8xf32>
    %126 = arith.mulf %122, %125 : vector<8x8xf32>
    %cst_26 = arith.constant 0xFF800000 : f32
    %127 = vector.broadcast %cst_26 : f32 to vector<8x8xf32>
    %128 = arith.select %124, %126, %127 : vector<8x8xi1>, vector<8x8xf32>
    %cst_27 = arith.constant dense<0xFF800000> : vector<8xf32>
    %129 = vector.multi_reduction <maximumf>, %128, %cst_27 [1] : vector<8x8xf32> to vector<8xf32>
    %130 = vector.shape_cast %129 : vector<8xf32> to vector<8x1xf32>
    %131 = arith.maximumf %121, %130 : vector<8x1xf32>
    %132 = arith.subf %121, %131 : vector<8x1xf32>
    %133 = math.exp %132 : vector<8x1xf32>
    %134 = vector.broadcast %131 : vector<8x1xf32> to vector<8x8xf32>
    %135 = arith.subf %128, %134 : vector<8x8xf32>
    %136 = math.exp %135 : vector<8x8xf32>
    %cst_28 = arith.constant dense<0.000000e+00> : vector<8xf32>
    %137 = vector.multi_reduction <add>, %136, %cst_28 [1] : vector<8x8xf32> to vector<8xf32>
    %138 = vector.shape_cast %137 : vector<8xf32> to vector<8x1xf32>
    %139 = arith.addf %133, %138 : vector<8x1xf32>
    %140 = arith.subf %131, %121 : vector<8x1xf32>
    %141 = math.log %139 : vector<8x1xf32>
    %142 = arith.addf %140, %141 : vector<8x1xf32>
    %143 = vector.shape_cast %142 : vector<8x1xf32> to vector<1x8x1xf32>
    %cst_29 = arith.constant dense<0.000000e+00> : vector<1xf32>
    %144 = vector.multi_reduction <add>, %143, %cst_29 [1, 2] : vector<1x8x1xf32> to vector<1xf32>
    %145 = vector.shape_cast %144 : vector<1xf32> to vector<1x1x1xf32>
    %146 = vector.extract %145[0, 0, 0] : f32 from vector<1x1x1xf32>
    %cst_30 = arith.constant 1.250000e-01 : f32
    %147 = arith.mulf %146, %cst_30 : f32
    %c0_31 = arith.constant 0 : index
    %c0_32 = arith.constant 0 : index
    %148 = memref.load %arg7[%c0_31, %c0_32] : memref<1x1xf32, #tpu.memory_space<smem>>
    memref.store %147, %arg7[%c0_31, %c0_32] : memref<1x1xf32, #tpu.memory_space<smem>>
    return
  }
}

</mosaic_0001>

<llo_original>
// kernel: tpu_custom_call.1
$region0: #{tpu_custom_call.1}
  #allocation0 [shape = 'u32[]', space=smem, size = 0x4, offset = 0x4, fixed_abs, tag = 'smem constant byte address 0x4 - core index']
  #allocation1 [shape = 'u32[72,128]{1,0:T(1,128)}', space=vmem, size = 0x9000, scoped, tag = 'internal scratch']
  %s0 = inlined_call_operand.hbm [shape: bf16[8,128], index: 0, kind: input, shape index: {}]
  %s1 = inlined_call_operand.hbm [shape: bf16[8,128], index: 1, kind: input, shape index: {}]
  %s2 = inlined_call_operand.hbm [shape: bf16[128,1024], index: 2, kind: input, shape index: {}]
  %s3 = inlined_call_operand.hbm [shape: bf16[128,128], index: 3, kind: input, shape index: {}]
  %s4 = inlined_call_operand.hbm [shape: bf16[64,64], index: 4, kind: input, shape index: {}]
  %s5 = inlined_call_operand.hbm [shape: f32[8,8], index: 5, kind: input, shape index: {}]
  %s6 = inlined_call_operand.hbm [shape: f32[8,8], index: 6, kind: input, shape index: {}]
  %s7 = inlined_call_operand.hbm [shape: f32[1,1], index: 7, kind: output, shape index: {}]
  %s8 = sld [smem:[#allocation0]]
  $region66: #{tpu_custom_call.1} parent=0
    _
  %s10 = ssub.s32 1, %s8
  %s11 = scalar_select 0, %s10, %s8
  $region1: #{tpu_custom_call.1} parent=0
    #allocation2 [shape = 'u8[2048]{0}', space=vmem, size = 0x800, scoped, tag = 'input window, operand 0, single buffered']
    #allocation3 [shape = 's32[1]{0}', space=sflag, size = 0x4, scoped, tag = 'scoped memory for tpu_custom_call.1']
    #allocation4 [shape = 's32[1]{0}', space=sflag, size = 0x4, scoped, tag = 'scoped memory for tpu_custom_call.1']
    #allocation5 [shape = 'u8[2048]{0}', space=vmem, size = 0x800, scoped, tag = 'input window, operand 1, single buffered']
    #allocation6 [shape = 's32[1]{0}', space=sflag, size = 0x4, scoped, tag = 'scoped memory for tpu_custom_call.1']
    #allocation7 [shape = 'u8[262144]{0}', space=vmem, size = 0x40000, scoped, tag = 'input window, operand 2, single buffered']
    #allocation8 [shape = 'u8[32768]{0}', space=vmem, size = 0x8000, scoped, tag = 'input window, operand 3, single buffered']
    #allocation9 [shape = 's32[1]{0}', space=sflag, size = 0x4, scoped, tag = 'scoped memory for tpu_custom_call.1']
    #allocation10 [shape = 'u8[16384]{0}', space=vmem, size = 0x4000, scoped, tag = 'input window, operand 4, single buffered']
    #allocation11 [shape = 'u8[4096]{0}', space=vmem, size = 0x1000, scoped, tag = 'input window, operand 5, single buffered']
    #allocation12 [shape = 's32[1]{0}', space=sflag, size = 0x4, scoped, tag = 'scoped memory for tpu_custom_call.1']
    #allocation13 [shape = 'u8[4096]{0}', space=vmem, size = 0x1000, scoped, tag = 'input window, operand 6, single buffered']
    #allocation14 [shape = 'u8[512]{0}', space=smem, size = 0x200, scoped, tag = 'output window, operand 0, single buffered']
    %12 = vsyncpa [#allocation3], 0
    %13 = vsyncpa [#allocation6], 0
    %14 = vsyncpa [#allocation9], 0
    %15 = vsyncpa [#allocation12], 0
    %16 = vsyncpa [#allocation4], 0
    // Predicated region
    $region2: #{tpu_custom_call.1} parent=1 // pred_check
      _
    $region3: #{tpu_custom_call.1} parent=1 // pred_check_branch
      %18 = sbr.rel (0) target = $region5
    $region4: #{tpu_custom_call.1} parent=1 // pred_region
      %20 = vsyncadd [#allocation3], 0
      %s22 = sshll.u32 %s0, 4
      %s23 = int_to_ptr.hbm [resolvable:$true] %s22
      %s24 = sshll.u32 [#allocation2], 4
      %s25 = int_to_ptr.vmem [resolvable:$true] %s24
      %27 = dma.hbm_to_vmem [thread:$0]  %s23, 64, %s25, [#allocation3]
    $region5: #{tpu_custom_call.1} parent=1 // pred_fallthru
      _
    // Predicated region
    $region6: #{tpu_custom_call.1} parent=1 // pred_check
      _
    $region7: #{tpu_custom_call.1} parent=1 // pred_check_branch
      %29 = sbr.rel (0) target = $region9
    $region8: #{tpu_custom_call.1} parent=1 // pred_region
      %31 = vsyncadd [#allocation6], 0
      %s33 = sshll.u32 %s1, 4
      %s34 = int_to_ptr.hbm [resolvable:$true] %s33
      %s35 = sshll.u32 [#allocation5], 4
      %s36 = int_to_ptr.vmem [resolvable:$true] %s35
      %38 = dma.hbm_to_vmem [thread:$0]  %s34, 64, %s36, [#allocation6]
    $region9: #{tpu_custom_call.1} parent=1 // pred_fallthru
      _
    // Predicated region
    $region10: #{tpu_custom_call.1} parent=1 // pred_check
      _
    $region11: #{tpu_custom_call.1} parent=1 // pred_check_branch
      %40 = sbr.rel (0) target = $region13
    $region12: #{tpu_custom_call.1} parent=1 // pred_region
      %42 = vsyncadd [#allocation6], 0
      %s43 = sshll.u32 %s2, 4
      %s44 = int_to_ptr.hbm [resolvable:$true] %s43
      %s45 = sshll.u32 [#allocation7], 4
      %s46 = int_to_ptr.vmem [resolvable:$true] %s45
      %51 = dma.hbm_to_vmem [thread:$0]  %s44, 8192, %s46, [#allocation6], 512, 512, 32
    $region13: #{tpu_custom_call.1} parent=1 // pred_fallthru
      _
    // Predicated region
    $region14: #{tpu_custom_call.1} parent=1 // pred_check
      _
    $region15: #{tpu_custom_call.1} parent=1 // pred_check_branch
      %53 = sbr.rel (0) target = $region17
    $region16: #{tpu_custom_call.1} parent=1 // pred_region
      %55 = vsyncadd [#allocation9], 0
      %s56 = sshll.u32 %s3, 4
      %s57 = int_to_ptr.hbm [resolvable:$true] %s56
      %s58 = sshll.u32 [#allocation8], 4
      %s59 = int_to_ptr.vmem [resolvable:$true] %s58
      %64 = dma.hbm_to_vmem [thread:$0]  %s57, 1024, %s59, [#allocation9], 64, 64, 4
    $region17: #{tpu_custom_call.1} parent=1 // pred_fallthru
      _
    // Predicated region
    $region18: #{tpu_custom_call.1} parent=1 // pred_check
      _
    $region19: #{tpu_custom_call.1} parent=1 // pred_check_branch
      %66 = sbr.rel (0) target = $region21
    $region20: #{tpu_custom_call.1} parent=1 // pred_region
      %68 = vsyncadd [#allocation9], 0
      %s69 = sshll.u32 %s4, 4
      %s70 = int_to_ptr.hbm [resolvable:$true] %s69
      %s71 = sshll.u32 [#allocation10], 4
      %s72 = int_to_ptr.vmem [resolvable:$true] %s71
      %77 = dma.hbm_to_vmem [thread:$0]  %s70, 512, %s72, [#allocation9], 64, 64, 4
    $region21: #{tpu_custom_call.1} parent=1 // pred_fallthru
      _
    // Predicated region
    $region22: #{tpu_custom_call.1} parent=1 // pred_check
      _
    $region23: #{tpu_custom_call.1} parent=1 // pred_check_branch
      %79 = sbr.rel (0) target = $region25
    $region24: #{tpu_custom_call.1} parent=1 // pred_region
      %81 = vsyncadd [#allocation12], 0
      %s83 = sshll.u32 %s5, 4
      %s84 = int_to_ptr.hbm [resolvable:$true] %s83
      %s85 = sshll.u32 [#allocation11], 4
      %s86 = int_to_ptr.vmem [resolvable:$true] %s85
      %88 = dma.hbm_to_vmem [thread:$0]  %s84, 128, %s86, [#allocation12]
    $region25: #{tpu_custom_call.1} parent=1 // pred_fallthru
      _
    // Predicated region
    $region26: #{tpu_custom_call.1} parent=1 // pred_check
      _
    $region27: #{tpu_custom_call.1} parent=1 // pred_check_branch
      %90 = sbr.rel (0) target = $region29
    $region28: #{tpu_custom_call.1} parent=1 // pred_region
      %92 = vsyncadd [#allocation12], 0
      %s94 = sshll.u32 %s6, 4
      %s95 = int_to_ptr.hbm [resolvable:$true] %s94
      %s96 = sshll.u32 [#allocation13], 4
      %s97 = int_to_ptr.vmem [resolvable:$true] %s96
      %99 = dma.hbm_to_vmem [thread:$0]  %s95, 128, %s97, [#allocation12]
    $region29: #{tpu_custom_call.1} parent=1 // pred_fallthru
      _
    // Predicated region
    $region30: #{tpu_custom_call.1} parent=1 // pred_check
      _
    $region31: #{tpu_custom_call.1} parent=1 // pred_check_branch
      %101 = sbr.rel (0) target = $region33
    $region32: #{tpu_custom_call.1} parent=1 // pred_region
      %103 = dma.done [#allocation3], 64
    $region33: #{tpu_custom_call.1} parent=1 // pred_fallthru
      _
    // Predicated region
    $region34: #{tpu_custom_call.1} parent=1 // pred_check
      _
    $region35: #{tpu_custom_call.1} parent=1 // pred_check_branch
      %105 = sbr.rel (0) target = $region37
    $region36: #{tpu_custom_call.1} parent=1 // pred_region
      %107 = dma.done [#allocation6], 64
    $region37: #{tpu_custom_call.1} parent=1 // pred_fallthru
      _
    // Predicated region
    $region38: #{tpu_custom_call.1} parent=1 // pred_check
      _
    $region39: #{tpu_custom_call.1} parent=1 // pred_check_branch
      %109 = sbr.rel (0) target = $region41
    $region40: #{tpu_custom_call.1} parent=1 // pred_region
      %111 = dma.done [#allocation6], 8192
    $region41: #{tpu_custom_call.1} parent=1 // pred_fallthru
      _
    // Predicated region
    $region42: #{tpu_custom_call.1} parent=1 // pred_check
      _
    $region43: #{tpu_custom_call.1} parent=1 // pred_check_branch
      %113 = sbr.rel (0) target = $region45
    $region44: #{tpu_custom_call.1} parent=1 // pred_region
      %115 = dma.done [#allocation9], 1024
    $region45: #{tpu_custom_call.1} parent=1 // pred_fallthru
      _
    // Predicated region
    $region46: #{tpu_custom_call.1} parent=1 // pred_check
      _
    $region47: #{tpu_custom_call.1} parent=1 // pred_check_branch
      %117 = sbr.rel (0) target = $region49
    $region48: #{tpu_custom_call.1} parent=1 // pred_region
      %119 = dma.done [#allocation9], 512
    $region49: #{tpu_custom_call.1} parent=1 // pred_fallthru
      _
    // Predicated region
    $region50: #{tpu_custom_call.1} parent=1 // pred_check
      _
    $region51: #{tpu_custom_call.1} parent=1 // pred_check_branch
      %121 = sbr.rel (0) target = $region53
    $region52: #{tpu_custom_call.1} parent=1 // pred_region
      %123 = dma.done [#allocation12], 128
    $region53: #{tpu_custom_call.1} parent=1 // pred_fallthru
      _
    // Predicated region
    $region54: #{tpu_custom_call.1} parent=1 // pred_check
      _
    $region55: #{tpu_custom_call.1} parent=1 // pred_check_branch
      %125 = sbr.rel (0) target = $region57
    $region56: #{tpu_custom_call.1} parent=1 // pred_region
      %127 = dma.done [#allocation12], 128
    $region57: #{tpu_custom_call.1} parent=1 // pred_fallthru
      _
    %v129 = vld [vmem:[#allocation5] sm:$0xf]
    %v130 = vld [vmem:[#allocation8] sm:$0xf]
    %v131 = vld [vmem:[#allocation8 + $0x4] sm:$0xf]
    %v132 = vld [vmem:[#allocation8 + $0x8] sm:$0xf]
    %v133 = vld [vmem:[#allocation8 + $0xc] sm:$0xf]
    %v134 = vld [vmem:[#allocation8 + $0x10] sm:$0xf]
    %v135 = vld [vmem:[#allocation8 + $0x14] sm:$0xf]
    %v136 = vld [vmem:[#allocation8 + $0x18] sm:$0xf]
    %v137 = vld [vmem:[#allocation8 + $0x1c] sm:$0xf]
    %v138 = vld [vmem:[#allocation8 + $0x20] sm:$0xf]
    %v139 = vld [vmem:[#allocation8 + $0x24] sm:$0xf]
    %v140 = vld [vmem:[#allocation8 + $0x28] sm:$0xf]
    %v141 = vld [vmem:[#allocation8 + $0x2c] sm:$0xf]
    %v142 = vld [vmem:[#allocation8 + $0x30] sm:$0xf]
    %v143 = vld [vmem:[#allocation8 + $0x34] sm:$0xf]
    %v144 = vld [vmem:[#allocation8 + $0x38] sm:$0xf]
    %v145 = vld [vmem:[#allocation8 + $0x3c] sm:$0xf]
    %v162 = vunpack.c.l.b16 %v130
    %v163 = vunpack.c.l.b16 %v131
    %v164 = vunpack.c.l.b16 %v132
    %v165 = vunpack.c.l.b16 %v133
    %v166 = vunpack.c.l.b16 %v134
    %v167 = vunpack.c.l.b16 %v135
    %v168 = vunpack.c.l.b16 %v136
    %v169 = vunpack.c.l.b16 %v137
    %v170 = vunpack.c.l.b16 %v138
    %v171 = vunpack.c.l.b16 %v139
    %v172 = vunpack.c.l.b16 %v140
    %v173 = vunpack.c.l.b16 %v141
    %v174 = vunpack.c.l.b16 %v142
    %v175 = vunpack.c.l.b16 %v143
    %v176 = vunpack.c.l.b16 %v144
    %v177 = vunpack.c.l.b16 %v145
    %v178 = vpack.c.b16 %v163, %v162
    %v179 = vpack.c.b16 %v165, %v164
    %v180 = vpack.c.b16 %v167, %v166
    %v181 = vpack.c.b16 %v169, %v168
    %v182 = vpack.c.b16 %v171, %v170
    %v183 = vpack.c.b16 %v173, %v172
    %v184 = vpack.c.b16 %v175, %v174
    %v185 = vpack.c.b16 %v177, %v176
    %194 = vmatpush.bf16.msra.mxu0 %v185
    %195 = vmatpush.bf16.msra.mxu0 %v184
    %196 = vmatpush.bf16.msra.mxu0 %v183
    %197 = vmatpush.bf16.msra.mxu0 %v182
    %198 = vmatpush.bf16.msra.mxu0 %v181
    %199 = vmatpush.bf16.msra.mxu0 %v180
    %200 = vmatpush.bf16.msra.mxu0 %v179
    %201 = vmatpush.bf16.msra.mxu0 %v178
    %202 = vmatmul.bf16.gmra.mxu0 %v129
    %v203 = vpop.f32.mrf.mxu0
    %v204 = vadd.f32 0.0, %v203
    %v205 = vpop.f32.mrf.mxu0
    %206 = vdwg.mxu0
    %v207 = vpack.c.bf16 %v204, %v204
    %v208 = vmul.f32 %v204, %v204
    %209 = vadd.xlane.f32.xlu0 %v208
    %v210 = vpop.xlane.xlu0 %209
    %v211 = vmax.f32 %v210, 1e-24
    %v212 = vrsqrt.pop %v211
    %v213 = vmul.f32 %v212, %v211
    %v214 = vmul.f32 %v213, %v212
    %v215 = vmul.f32 0.5, %v214
    %v216 = vsub.f32 1.5, %v215
    %v217 = vmul.f32 %v212, %v216
    %vm218 = vweird.f32 %v211
    %vm219 = vweird.f32 %v212
    %vm220 = vmor %vm218, %vm219
    %v221 = vsel %vm220, %v212, %v217
    %v222 = vmul.f32 %v204, %v221
    %v223 = vpack.c.bf16 %v222, %v222
    %v224 = vld [vmem:[#allocation2] sm:$0xf]
    %v225 = vld [vmem:[#allocation7] sm:$0xff]
    %v226 = vld [vmem:[#allocation7 + $0x8] sm:$0xff]
    %v227 = vld [vmem:[#allocation7 + $0x10] sm:$0xff]
    %v228 = vld [vmem:[#allocation7 + $0x18] sm:$0xff]
    %v229 = vld [vmem:[#allocation7 + $0x20] sm:$0xff]
    %v230 = vld [vmem:[#allocation7 + $0x28] sm:$0xff]
    %v231 = vld [vmem:[#allocation7 + $0x30] sm:$0xff]
    %v232 = vld [vmem:[#allocation7 + $0x38] sm:$0xff]
    %v233 = vld [vmem:[#allocation7 + $0x40] sm:$0xff]
    %v234 = vld [vmem:[#allocation7 + $0x48] sm:$0xff]
    %v235 = vld [vmem:[#allocation7 + $0x50] sm:$0xff]
    %v236 = vld [vmem:[#allocation7 + $0x58] sm:$0xff]
    %v237 = vld [vmem:[#allocation7 + $0x60] sm:$0xff]
    %v238 = vld [vmem:[#allocation7 + $0x68] sm:$0xff]
    %v239 = vld [vmem:[#allocation7 + $0x70] sm:$0xff]
    %v240 = vld [vmem:[#allocation7 + $0x78] sm:$0xff]
    %v241 = vld [vmem:[#allocation7 + $0x80] sm:$0xff]
    %v242 = vld [vmem:[#allocation7 + $0x88] sm:$0xff]
    %v243 = vld [vmem:[#allocation7 + $0x90] sm:$0xff]
    %v244 = vld [vmem:[#allocation7 + $0x98] sm:$0xff]
    %v245 = vld [vmem:[#allocation7 + $0xa0] sm:$0xff]
    %v246 = vld [vmem:[#allocation7 + $0xa8] sm:$0xff]
    %v247 = vld [vmem:[#allocation7 + $0xb0] sm:$0xff]
    %v248 = vld [vmem:[#allocation7 + $0xb8] sm:$0xff]
    %v249 = vld [vmem:[#allocation7 + $0xc0] sm:$0xff]
    %v250 = vld [vmem:[#allocation7 + $0xc8] sm:$0xff]
    %v251 = vld [vmem:[#allocation7 + $0xd0] sm:$0xff]
    %v252 = vld [vmem:[#allocation7 + $0xd8] sm:$0xff]
    %v253 = vld [vmem:[#allocation7 + $0xe0] sm:$0xff]
    %v254 = vld [vmem:[#allocation7 + $0xe8] sm:$0xff]
    %v255 = vld [vmem:[#allocation7 + $0xf0] sm:$0xff]
    %v256 = vld [vmem:[#allocation7 + $0xf8] sm:$0xff]
    %v257 = vld [vmem:[#allocation7 + $0x100] sm:$0xff]
    %v258 = vld [vmem:[#allocation7 + $0x108] sm:$0xff]
    %v259 = vld [vmem:[#allocation7 + $0x110] sm:$0xff]
    %v260 = vld [vmem:[#allocation7 + $0x118] sm:$0xff]
    %v261 = vld [vmem:[#allocation7 + $0x120] sm:$0xff]
    %v262 = vld [vmem:[#allocation7 + $0x128] sm:$0xff]
    %v263 = vld [vmem:[#allocation7 + $0x130] sm:$0xff]
    %v264 = vld [vmem:[#allocation7 + $0x138] sm:$0xff]
    %v265 = vld [vmem:[#allocation7 + $0x140] sm:$0xff]
    %v266 = vld [vmem:[#allocation7 + $0x148] sm:$0xff]
    %v267 = vld [vmem:[#allocation7 + $0x150] sm:$0xff]
    %v268 = vld [vmem:[#allocation7 + $0x158] sm:$0xff]
    %v269 = vld [vmem:[#allocation7 + $0x160] sm:$0xff]
    %v270 = vld [vmem:[#allocation7 + $0x168] sm:$0xff]
    %v271 = vld [vmem:[#allocation7 + $0x170] sm:$0xff]
    %v272 = vld [vmem:[#allocation7 + $0x178] sm:$0xff]
    %v273 = vld [vmem:[#allocation7 + $0x180] sm:$0xff]
    %v274 = vld [vmem:[#allocation7 + $0x188] sm:$0xff]
    %v275 = vld [vmem:[#allocation7 + $0x190] sm:$0xff]
    %v276 = vld [vmem:[#allocation7 + $0x198] sm:$0xff]
    %v277 = vld [vmem:[#allocation7 + $0x1a0] sm:$0xff]
    %v278 = vld [vmem:[#allocation7 + $0x1a8] sm:$0xff]
    %v279 = vld [vmem:[#allocation7 + $0x1b0] sm:$0xff]
    %v280 = vld [vmem:[#allocation7 + $0x1b8] sm:$0xff]
    %v281 = vld [vmem:[#allocation7 + $0x1c0] sm:$0xff]
    %v282 = vld [vmem:[#allocation7 + $0x1c8] sm:$0xff]
    %v283 = vld [vmem:[#allocation7 + $0x1d0] sm:$0xff]
    %v284 = vld [vmem:[#allocation7 + $0x1d8] sm:$0xff]
    %v285 = vld [vmem:[#allocation7 + $0x1e0] sm:$0xff]
    %v286 = vld [vmem:[#allocation7 + $0x1e8] sm:$0xff]
    %v287 = vld [vmem:[#allocation7 + $0x1f0] sm:$0xff]
    %v288 = vld [vmem:[#allocation7 + $0x1f8] sm:$0xff]
    %v289 = vld [vmem:[#allocation10] sm:$0xf]
    %v290 = vld [vmem:[#allocation10 + $0x4] sm:$0xf]
    %v291 = vld [vmem:[#allocation10 + $0x8] sm:$0xf]
    %v292 = vld [vmem:[#allocation10 + $0xc] sm:$0xf]
    %v293 = vld [vmem:[#allocation10 + $0x10] sm:$0xf]
    %v294 = vld [vmem:[#allocation10 + $0x14] sm:$0xf]
    %v295 = vld [vmem:[#allocation10 + $0x18] sm:$0xf]
    %v296 = vld [vmem:[#allocation10 + $0x1c] sm:$0xf]
    %v361 = vunpack.c.l.b16 %v225
    %v362 = vunpack.c.h.b16 %v225
    %v363 = vunpack.c.l.b16 %v226
    %v364 = vunpack.c.h.b16 %v226
    %v365 = vunpack.c.l.b16 %v227
    %v366 = vunpack.c.h.b16 %v227
    %v367 = vunpack.c.l.b16 %v228
    %v368 = vunpack.c.h.b16 %v228
    %v369 = vunpack.c.l.b16 %v229
    %v370 = vunpack.c.h.b16 %v229
    %v371 = vunpack.c.l.b16 %v230
    %v372 = vunpack.c.h.b16 %v230
    %v373 = vunpack.c.l.b16 %v231
    %v374 = vunpack.c.h.b16 %v231
    %v375 = vunpack.c.l.b16 %v232
    %v376 = vunpack.c.h.b16 %v232
    %v377 = vunpack.c.l.b16 %v233
    %v378 = vunpack.c.h.b16 %v233
    %v379 = vunpack.c.l.b16 %v234
    %v380 = vunpack.c.h.b16 %v234
    %v381 = vunpack.c.l.b16 %v235
    %v382 = vunpack.c.h.b16 %v235
    %v383 = vunpack.c.l.b16 %v236
    %v384 = vunpack.c.h.b16 %v236
    %v385 = vunpack.c.l.b16 %v237
    %v386 = vunpack.c.h.b16 %v237
    %v387 = vunpack.c.l.b16 %v238
    %v388 = vunpack.c.h.b16 %v238
    %v389 = vunpack.c.l.b16 %v239
    %v390 = vunpack.c.h.b16 %v239
    %v391 = vunpack.c.l.b16 %v240
    %v392 = vunpack.c.h.b16 %v240
    %v393 = vunpack.c.l.b16 %v241
    %v394 = vunpack.c.h.b16 %v241
    %v395 = vunpack.c.l.b16 %v242
    %v396 = vunpack.c.h.b16 %v242
    %v397 = vunpack.c.l.b16 %v243
    %v398 = vunpack.c.h.b16 %v243
    %v399 = vunpack.c.l.b16 %v244
    %v400 = vunpack.c.h.b16 %v244
    %v401 = vunpack.c.l.b16 %v245
    %v402 = vunpack.c.h.b16 %v245
    %v403 = vunpack.c.l.b16 %v246
    %v404 = vunpack.c.h.b16 %v246
    %v405 = vunpack.c.l.b16 %v247
    %v406 = vunpack.c.h.b16 %v247
    %v407 = vunpack.c.l.b16 %v248
    %v408 = vunpack.c.h.b16 %v248
    %v409 = vunpack.c.l.b16 %v249
    %v410 = vunpack.c.h.b16 %v249
    %v411 = vunpack.c.l.b16 %v250
    %v412 = vunpack.c.h.b16 %v250
    %v413 = vunpack.c.l.b16 %v251
    %v414 = vunpack.c.h.b16 %v251
    %v415 = vunpack.c.l.b16 %v252
    %v416 = vunpack.c.h.b16 %v252
    %v417 = vunpack.c.l.b16 %v253
    %v418 = vunpack.c.h.b16 %v253
    %v419 = vunpack.c.l.b16 %v254
    %v420 = vunpack.c.h.b16 %v254
    %v421 = vunpack.c.l.b16 %v255
    %v422 = vunpack.c.h.b16 %v255
    %v423 = vunpack.c.l.b16 %v256
    %v424 = vunpack.c.h.b16 %v256
    %v425 = vunpack.c.l.b16 %v257
    %v426 = vunpack.c.h.b16 %v257
    %v427 = vunpack.c.l.b16 %v258
    %v428 = vunpack.c.h.b16 %v258
    %v429 = vunpack.c.l.b16 %v259
    %v430 = vunpack.c.h.b16 %v259
    %v431 = vunpack.c.l.b16 %v260
    %v432 = vunpack.c.h.b16 %v260
    %v433 = vunpack.c.l.b16 %v261
    %v434 = vunpack.c.h.b16 %v261
    %v435 = vunpack.c.l.b16 %v262
    %v436 = vunpack.c.h.b16 %v262
    %v437 = vunpack.c.l.b16 %v263
    %v438 = vunpack.c.h.b16 %v263
    %v439 = vunpack.c.l.b16 %v264
    %v440 = vunpack.c.h.b16 %v264
    %v441 = vunpack.c.l.b16 %v265
    %v442 = vunpack.c.h.b16 %v265
    %v443 = vunpack.c.l.b16 %v266
    %v444 = vunpack.c.h.b16 %v266
    %v445 = vunpack.c.l.b16 %v267
    %v446 = vunpack.c.h.b16 %v267
    %v447 = vunpack.c.l.b16 %v268
    %v448 = vunpack.c.h.b16 %v268
    %v449 = vunpack.c.l.b16 %v269
    %v450 = vunpack.c.h.b16 %v269
    %v451 = vunpack.c.l.b16 %v270
    %v452 = vunpack.c.h.b16 %v270
    %v453 = vunpack.c.l.b16 %v271
    %v454 = vunpack.c.h.b16 %v271
    %v455 = vunpack.c.l.b16 %v272
    %v456 = vunpack.c.h.b16 %v272
    %v457 = vunpack.c.l.b16 %v273
    %v458 = vunpack.c.h.b16 %v273
    %v459 = vunpack.c.l.b16 %v274
    %v460 = vunpack.c.h.b16 %v274
    %v461 = vunpack.c.l.b16 %v275
    %v462 = vunpack.c.h.b16 %v275
    %v463 = vunpack.c.l.b16 %v276
    %v464 = vunpack.c.h.b16 %v276
    %v465 = vunpack.c.l.b16 %v277
    %v466 = vunpack.c.h.b16 %v277
    %v467 = vunpack.c.l.b16 %v278
    %v468 = vunpack.c.h.b16 %v278
    %v469 = vunpack.c.l.b16 %v279
    %v470 = vunpack.c.h.b16 %v279
    %v471 = vunpack.c.l.b16 %v280
    %v472 = vunpack.c.h.b16 %v280
    %v473 = vunpack.c.l.b16 %v281
    %v474 = vunpack.c.h.b16 %v281
    %v475 = vunpack.c.l.b16 %v282
    %v476 = vunpack.c.h.b16 %v282
    %v477 = vunpack.c.l.b16 %v283
    %v478 = vunpack.c.h.b16 %v283
    %v479 = vunpack.c.l.b16 %v284
    %v480 = vunpack.c.h.b16 %v284
    %v481 = vunpack.c.l.b16 %v285
    %v482 = vunpack.c.h.b16 %v285
    %v483 = vunpack.c.l.b16 %v286
    %v484 = vunpack.c.h.b16 %v286
    %v485 = vunpack.c.l.b16 %v287
    %v486 = vunpack.c.h.b16 %v287
    %v487 = vunpack.c.l.b16 %v288
    %v488 = vunpack.c.h.b16 %v288
    %v489 = vpack.c.b16 %v369, %v361
    %v490 = vpack.c.b16 %v370, %v362
    %v491 = vpack.c.b16 %v371, %v363
    %v492 = vpack.c.b16 %v372, %v364
    %v493 = vpack.c.b16 %v373, %v365
    %v494 = vpack.c.b16 %v374, %v366
    %v495 = vpack.c.b16 %v375, %v367
    %v496 = vpack.c.b16 %v376, %v368
    %v497 = vpack.c.b16 %v385, %v377
    %v498 = vpack.c.b16 %v386, %v378
    %v499 = vpack.c.b16 %v387, %v379
    %v500 = vpack.c.b16 %v388, %v380
    %v501 = vpack.c.b16 %v389, %v381
    %v502 = vpack.c.b16 %v390, %v382
    %v503 = vpack.c.b16 %v391, %v383
    %v504 = vpack.c.b16 %v392, %v384
    %v505 = vpack.c.b16 %v401, %v393
    %v506 = vpack.c.b16 %v402, %v394
    %v507 = vpack.c.b16 %v403, %v395
    %v508 = vpack.c.b16 %v404, %v396
    %v509 = vpack.c.b16 %v405, %v397
    %v510 = vpack.c.b16 %v406, %v398
    %v511 = vpack.c.b16 %v407, %v399
    %v512 = vpack.c.b16 %v408, %v400
    %v513 = vpack.c.b16 %v417, %v409
    %v514 = vpack.c.b16 %v418, %v410
    %v515 = vpack.c.b16 %v419, %v411
    %v516 = vpack.c.b16 %v420, %v412
    %v517 = vpack.c.b16 %v421, %v413
    %v518 = vpack.c.b16 %v422, %v414
    %v519 = vpack.c.b16 %v423, %v415
    %v520 = vpack.c.b16 %v424, %v416
    %v521 = vpack.c.b16 %v433, %v425
    %v522 = vpack.c.b16 %v434, %v426
    %v523 = vpack.c.b16 %v435, %v427
    %v524 = vpack.c.b16 %v436, %v428
    %v525 = vpack.c.b16 %v437, %v429
    %v526 = vpack.c.b16 %v438, %v430
    %v527 = vpack.c.b16 %v439, %v431
    %v528 = vpack.c.b16 %v440, %v432
    %v529 = vpack.c.b16 %v449, %v441
    %v530 = vpack.c.b16 %v450, %v442
    %v531 = vpack.c.b16 %v451, %v443
    %v532 = vpack.c.b16 %v452, %v444
    %v533 = vpack.c.b16 %v453, %v445
    %v534 = vpack.c.b16 %v454, %v446
    %v535 = vpack.c.b16 %v455, %v447
    %v536 = vpack.c.b16 %v456, %v448
    %v537 = vpack.c.b16 %v465, %v457
    %v538 = vpack.c.b16 %v466, %v458
    %v539 = vpack.c.b16 %v467, %v459
    %v540 = vpack.c.b16 %v468, %v460
    %v541 = vpack.c.b16 %v469, %v461
    %v542 = vpack.c.b16 %v470, %v462
    %v543 = vpack.c.b16 %v471, %v463
    %v544 = vpack.c.b16 %v472, %v464
    %v545 = vpack.c.b16 %v481, %v473
    %v546 = vpack.c.b16 %v482, %v474
    %v547 = vpack.c.b16 %v483, %v475
    %v548 = vpack.c.b16 %v484, %v476
    %v549 = vpack.c.b16 %v485, %v477
    %v550 = vpack.c.b16 %v486, %v478
    %v551 = vpack.c.b16 %v487, %v479
    %v552 = vpack.c.b16 %v488, %v480
    %617 = vmatpush.bf16.msra.mxu0 %v545
    %618 = vmatpush.bf16.msra.mxu0 %v537
    %619 = vmatpush.bf16.msra.mxu0 %v529
    %620 = vmatpush.bf16.msra.mxu0 %v521
    %621 = vmatpush.bf16.msra.mxu0 %v513
    %622 = vmatpush.bf16.msra.mxu0 %v505
    %623 = vmatpush.bf16.msra.mxu0 %v497
    %624 = vmatpush.bf16.msra.mxu0 %v489
    %625 = vmatmul.bf16.gmra.mxu0 %v224
    %v626 = vpop.f32.mrf.mxu0
    %v627 = vadd.f32 0.0, %v626
    %v628 = vpop.f32.mrf.mxu0
    %629 = vdwg.mxu0
    %630 = vmatpush.bf16.msra.mxu0 %v546
    %631 = vmatpush.bf16.msra.mxu0 %v538
    %632 = vmatpush.bf16.msra.mxu0 %v530
    %633 = vmatpush.bf16.msra.mxu0 %v522
    %634 = vmatpush.bf16.msra.mxu0 %v514
    %635 = vmatpush.bf16.msra.mxu0 %v506
    %636 = vmatpush.bf16.msra.mxu0 %v498
    %637 = vmatpush.bf16.msra.mxu0 %v490
    %638 = vmatmul.bf16.gmra.mxu0 %v224
    %v639 = vpop.f32.mrf.mxu0
    %v640 = vadd.f32 0.0, %v639
    %v641 = vpop.f32.mrf.mxu0
    %642 = vdwg.mxu0
    %643 = vmatpush.bf16.msra.mxu0 %v547
    %644 = vmatpush.bf16.msra.mxu0 %v539
    %645 = vmatpush.bf16.msra.mxu0 %v531
    %646 = vmatpush.bf16.msra.mxu0 %v523
    %647 = vmatpush.bf16.msra.mxu0 %v515
    %648 = vmatpush.bf16.msra.mxu0 %v507
    %649 = vmatpush.bf16.msra.mxu0 %v499
    %650 = vmatpush.bf16.msra.mxu0 %v491
    %651 = vmatmul.bf16.gmra.mxu0 %v224
    %v652 = vpop.f32.mrf.mxu0
    %v653 = vadd.f32 0.0, %v652
    %v654 = vpop.f32.mrf.mxu0
    %655 = vdwg.mxu0
    %656 = vmatpush.bf16.msra.mxu0 %v548
    %657 = vmatpush.bf16.msra.mxu0 %v540
    %658 = vmatpush.bf16.msra.mxu0 %v532
    %659 = vmatpush.bf16.msra.mxu0 %v524
    %660 = vmatpush.bf16.msra.mxu0 %v516
    %661 = vmatpush.bf16.msra.mxu0 %v508
    %662 = vmatpush.bf16.msra.mxu0 %v500
    %663 = vmatpush.bf16.msra.mxu0 %v492
    %664 = vmatmul.bf16.gmra.mxu0 %v224
    %v665 = vpop.f32.mrf.mxu0
    %v666 = vadd.f32 0.0, %v665
    %v667 = vpop.f32.mrf.mxu0
    %668 = vdwg.mxu0
    %669 = vmatpush.bf16.msra.mxu0 %v549
    %670 = vmatpush.bf16.msra.mxu0 %v541
    %671 = vmatpush.bf16.msra.mxu0 %v533
    %672 = vmatpush.bf16.msra.mxu0 %v525
    %673 = vmatpush.bf16.msra.mxu0 %v517
    %674 = vmatpush.bf16.msra.mxu0 %v509
    %675 = vmatpush.bf16.msra.mxu0 %v501
    %676 = vmatpush.bf16.msra.mxu0 %v493
    %677 = vmatmul.bf16.gmra.mxu0 %v224
    %v678 = vpop.f32.mrf.mxu0
    %v679 = vadd.f32 0.0, %v678
    %v680 = vpop.f32.mrf.mxu0
    %681 = vdwg.mxu0
    %682 = vmatpush.bf16.msra.mxu0 %v550
    %683 = vmatpush.bf16.msra.mxu0 %v542
    %684 = vmatpush.bf16.msra.mxu0 %v534
    %685 = vmatpush.bf16.msra.mxu0 %v526
    %686 = vmatpush.bf16.msra.mxu0 %v518
    %687 = vmatpush.bf16.msra.mxu0 %v510
    %688 = vmatpush.bf16.msra.mxu0 %v502
    %689 = vmatpush.bf16.msra.mxu0 %v494
    %690 = vmatmul.bf16.gmra.mxu0 %v224
    %v691 = vpop.f32.mrf.mxu0
    %v692 = vadd.f32 0.0, %v691
    %v693 = vpop.f32.mrf.mxu0
    %694 = vdwg.mxu0
    %695 = vmatpush.bf16.msra.mxu0 %v551
    %696 = vmatpush.bf16.msra.mxu0 %v543
    %697 = vmatpush.bf16.msra.mxu0 %v535
    %698 = vmatpush.bf16.msra.mxu0 %v527
    %699 = vmatpush.bf16.msra.mxu0 %v519
    %700 = vmatpush.bf16.msra.mxu0 %v511
    %701 = vmatpush.bf16.msra.mxu0 %v503
    %702 = vmatpush.bf16.msra.mxu0 %v495
    %703 = vmatmul.bf16.gmra.mxu0 %v224
    %v704 = vpop.f32.mrf.mxu0
    %v705 = vadd.f32 0.0, %v704
    %v706 = vpop.f32.mrf.mxu0
    %707 = vdwg.mxu0
    %708 = vmatpush.bf16.msra.mxu0 %v552
    %709 = vmatpush.bf16.msra.mxu0 %v544
    %710 = vmatpush.bf16.msra.mxu0 %v536
    %711 = vmatpush.bf16.msra.mxu0 %v528
    %712 = vmatpush.bf16.msra.mxu0 %v520
    %713 = vmatpush.bf16.msra.mxu0 %v512
    %714 = vmatpush.bf16.msra.mxu0 %v504
    %715 = vmatpush.bf16.msra.mxu0 %v496
    %716 = vmatmul.bf16.gmra.mxu0 %v224
    %v717 = vpop.f32.mrf.mxu0
    %v718 = vadd.f32 0.0, %v717
    %v719 = vpop.f32.mrf.mxu0
    %720 = vdwg.mxu0
    %v721 = vpack.c.bf16 %v640, %v627
    %v722 = vpack.c.bf16 %v666, %v653
    %v723 = vpack.c.bf16 %v692, %v679
    %v724 = vpack.c.bf16 %v718, %v705
    %725 = vmatpush.bf16.xpose.msra.mxu0 0
    %726 = vmatpush.bf16.xpose.msra.mxu0 0
    %727 = vmatpush.bf16.xpose.msra.mxu0 0
    %728 = vmatpush.bf16.xpose.msra.mxu0 0
    %729 = vmatpush.bf16.xpose.msra.mxu0 0
    %730 = vmatpush.bf16.xpose.msra.mxu0 0
    %731 = vmatpush.bf16.xpose.msra.mxu0 0
    %732 = vmatpush.bf16.xpose.msra.mxu0 %v207
    %733 = vmatmul.bf16.gmra.mxu0 %v721
    %v734 = vpop.f32.mrf.mxu0
    %v735 = vadd.f32 0.0, %v734
    %v736 = vpop.f32.mrf.mxu0
    %v737 = vadd.f32 0.0, %v736
    %738 = vmatmul.bf16.gmra.mxu0 %v722
    %v739 = vpop.f32.mrf.mxu0
    %v740 = vadd.f32 0.0, %v739
    %v741 = vpop.f32.mrf.mxu0
    %v742 = vadd.f32 0.0, %v741
    %743 = vmatmul.bf16.gmra.mxu0 %v723
    %v744 = vpop.f32.mrf.mxu0
    %v745 = vadd.f32 0.0, %v744
    %v746 = vpop.f32.mrf.mxu0
    %v747 = vadd.f32 0.0, %v746
    %748 = vmatmul.bf16.gmra.mxu0 %v724
    %v749 = vpop.f32.mrf.mxu0
    %v750 = vadd.f32 0.0, %v749
    %v751 = vpop.f32.mrf.mxu0
    %v752 = vadd.f32 0.0, %v751
    %753 = vdwg.mxu0
    %754 = vmatpush.bf16.xpose.msra.mxu0 0
    %755 = vmatpush.bf16.xpose.msra.mxu0 0
    %756 = vmatpush.bf16.xpose.msra.mxu0 0
    %757 = vmatpush.bf16.xpose.msra.mxu0 0
    %758 = vmatpush.bf16.xpose.msra.mxu0 0
    %759 = vmatpush.bf16.xpose.msra.mxu0 0
    %760 = vmatpush.bf16.xpose.msra.mxu0 0
    %761 = vmatpush.bf16.xpose.msra.mxu0 %v223
    %762 = vmatmul.bf16.gmra.mxu0 %v721
    %v763 = vpop.f32.mrf.mxu0
    %v764 = vadd.f32 0.0, %v763
    %v765 = vpop.f32.mrf.mxu0
    %v766 = vadd.f32 0.0, %v765
    %767 = vmatmul.bf16.gmra.mxu0 %v722
    %v768 = vpop.f32.mrf.mxu0
    %v769 = vadd.f32 0.0, %v768
    %v770 = vpop.f32.mrf.mxu0
    %v771 = vadd.f32 0.0, %v770
    %772 = vmatmul.bf16.gmra.mxu0 %v723
    %v773 = vpop.f32.mrf.mxu0
    %v774 = vadd.f32 0.0, %v773
    %v775 = vpop.f32.mrf.mxu0
    %v776 = vadd.f32 0.0, %v775
    %777 = vmatmul.bf16.gmra.mxu0 %v724
    %v778 = vpop.f32.mrf.mxu0
    %v779 = vadd.f32 0.0, %v778
    %v780 = vpop.f32.mrf.mxu0
    %v781 = vadd.f32 0.0, %v780
    %782 = vdwg.mxu0
    %v783 = vmax.f32 %v735, %v737
    %v784 = vmax.f32 %v783, %v740
    %v785 = vmax.f32 %v784, %v742
    %v786 = vmax.f32 %v785, %v745
    %v787 = vmax.f32 %v786, %v747
    %v788 = vmax.f32 %v787, %v750
    %v789 = vmax.f32 %v788, %v752
    %v790 = vsub.f32 %v735, %v789
    %v791 = vmul.f32 %v790, 1.442695
    %v792 = vpow.pop %v791
    %v793 = vsub.f32 %v737, %v789
    %v794 = vmul.f32 %v793, 1.442695
    %v795 = vpow.pop %v794
    %v796 = vsub.f32 %v740, %v789
    %v797 = vmul.f32 %v796, 1.442695
    %v798 = vpow.pop %v797
    %v799 = vsub.f32 %v742, %v789
    %v800 = vmul.f32 %v799, 1.442695
    %v801 = vpow.pop %v800
    %v802 = vsub.f32 %v745, %v789
    %v803 = vmul.f32 %v802, 1.442695
    %v804 = vpow.pop %v803
    %v805 = vsub.f32 %v747, %v789
    %v806 = vmul.f32 %v805, 1.442695
    %v807 = vpow.pop %v806
    %v808 = vsub.f32 %v750, %v789
    %v809 = vmul.f32 %v808, 1.442695
    %v810 = vpow.pop %v809
    %v811 = vsub.f32 %v752, %v789
    %v812 = vmul.f32 %v811, 1.442695
    %v813 = vpow.pop %v812
    %v814 = vmul.f32 %v792, %v764
    %v815 = vmul.f32 %v795, %v766
    %v816 = vadd.f32 %v814, %v815
    %v817 = vmul.f32 %v798, %v769
    %v818 = vadd.f32 %v816, %v817
    %v819 = vmul.f32 %v801, %v771
    %v820 = vadd.f32 %v818, %v819
    %v821 = vmul.f32 %v804, %v774
    %v822 = vadd.f32 %v820, %v821
    %v823 = vmul.f32 %v807, %v776
    %v824 = vadd.f32 %v822, %v823
    %v825 = vmul.f32 %v810, %v779
    %v826 = vadd.f32 %v824, %v825
    %v827 = vmul.f32 %v813, %v781
    %v828 = vadd.f32 %v826, %v827
    %829 = vmatpush.xpose.msra.mxu0 0.0
    %830 = vmatpush.xpose.msra.mxu0 0.0
    %831 = vmatpush.xpose.msra.mxu0 0.0
    %832 = vmatpush.xpose.msra.mxu0 0.0
    %833 = vmatpush.xpose.msra.mxu0 0.0
    %834 = vmatpush.xpose.msra.mxu0 0.0
    %835 = vmatpush.xpose.msra.mxu0 0.0
    %836 = vmatpush.xpose.msra.mxu0 0.0
    %837 = vmatpush.xpose.msra.mxu0 %v718
    %838 = vmatpush.xpose.msra.mxu0 %v705
    %839 = vmatpush.xpose.msra.mxu0 %v692
    %840 = vmatpush.xpose.msra.mxu0 %v679
    %841 = vmatpush.xpose.msra.mxu0 %v666
    %842 = vmatpush.xpose.msra.mxu0 %v653
    %843 = vmatpush.xpose.msra.mxu0 %v640
    %844 = vmatpush.xpose.msra.mxu0 %v627
    %845 = vmatmul.f32.gmra.mxu0 %v627
    %v846 = vpop.f32.mrf.mxu0
    %v847 = vadd.f32 0.0, %v846
    %848 = vmatmul.f32.gmra.mxu0 %v640
    %v849 = vpop.f32.mrf.mxu0
    %v850 = vadd.f32 0.0, %v849
    %851 = vmatmul.f32.gmra.mxu0 %v653
    %v852 = vpop.f32.mrf.mxu0
    %v853 = vadd.f32 0.0, %v852
    %854 = vmatmul.f32.gmra.mxu0 %v666
    %v855 = vpop.f32.mrf.mxu0
    %v856 = vadd.f32 0.0, %v855
    %857 = vmatmul.f32.gmra.mxu0 %v679
    %v858 = vpop.f32.mrf.mxu0
    %v859 = vadd.f32 0.0, %v858
    %860 = vmatmul.f32.gmra.mxu0 %v692
    %v861 = vpop.f32.mrf.mxu0
    %v862 = vadd.f32 0.0, %v861
    %863 = vmatmul.f32.gmra.mxu0 %v705
    %v864 = vpop.f32.mrf.mxu0
    %v865 = vadd.f32 0.0, %v864
    %866 = vmatmul.f32.gmra.mxu0 %v718
    %v867 = vpop.f32.mrf.mxu0
    %v868 = vadd.f32 0.0, %v867
    %869 = vdwg.mxu0
    %v870 = vunpack.c.l.bf16 %v289
    %v871 = vunpack.c.l.bf16 %v290
    %v872 = vunpack.c.l.bf16 %v291
    %v873 = vunpack.c.l.bf16 %v292
    %v874 = vunpack.c.l.bf16 %v293
    %v875 = vunpack.c.l.bf16 %v294
    %v876 = vunpack.c.l.bf16 %v295
    %v877 = vunpack.c.l.bf16 %v296
    %v878 = vmul.f32 %v847, %v870
    %v879 = vmul.f32 %v850, %v871
    %v880 = vmul.f32 %v853, %v872
    %v881 = vmul.f32 %v856, %v873
    %v882 = vmul.f32 %v859, %v874
    %v883 = vmul.f32 %v862, %v875
    %v884 = vmul.f32 %v865, %v876
    %v885 = vmul.f32 %v868, %v877
    %vm886 = vcmask 523264
    %v888 = vsel %vm886, %v878, 0
    %v891 = vsel %vm886, %v879, 0
    %v894 = vsel %vm886, %v880, 0
    %v897 = vsel %vm886, %v881, 0
    %v900 = vsel %vm886, %v882, 0
    %v903 = vsel %vm886, %v883, 0
    %v906 = vsel %vm886, %v884, 0
    %v909 = vsel %vm886, %v885, 0
    %911 = vmatpush.msra.mxu0 0.0
    %912 = vmatpush.msra.mxu0 0.0
    %913 = vmatpush.msra.mxu0 0.0
    %914 = vmatpush.msra.mxu0 0.0
    %915 = vmatpush.msra.mxu0 0.0
    %916 = vmatpush.msra.mxu0 0.0
    %917 = vmatpush.msra.mxu0 0.0
    %918 = vmatpush.msra.mxu0 0.0
    %919 = vmatpush.msra.mxu0 %v813
    %920 = vmatpush.msra.mxu0 %v810
    %921 = vmatpush.msra.mxu0 %v807
    %922 = vmatpush.msra.mxu0 %v804
    %923 = vmatpush.msra.mxu0 %v801
    %924 = vmatpush.msra.mxu0 %v798
    %925 = vmatpush.msra.mxu0 %v795
    %926 = vmatpush.msra.mxu0 %v792
    %927 = vmatmul.f32.gmra.mxu0 %v888
    %v928 = vpop.f32.mrf.mxu0
    %v929 = vadd.f32 0.0, %v928
    %930 = vmatmul.f32.gmra.mxu0 %v891
    %v931 = vpop.f32.mrf.mxu0
    %v932 = vadd.f32 0.0, %v931
    %933 = vmatmul.f32.gmra.mxu0 %v894
    %v934 = vpop.f32.mrf.mxu0
    %v935 = vadd.f32 0.0, %v934
    %936 = vmatmul.f32.gmra.mxu0 %v897
    %v937 = vpop.f32.mrf.mxu0
    %v938 = vadd.f32 0.0, %v937
    %939 = vmatmul.f32.gmra.mxu0 %v900
    %v940 = vpop.f32.mrf.mxu0
    %v941 = vadd.f32 0.0, %v940
    %942 = vmatmul.f32.gmra.mxu0 %v903
    %v943 = vpop.f32.mrf.mxu0
    %v944 = vadd.f32 0.0, %v943
    %945 = vmatmul.f32.gmra.mxu0 %v906
    %v946 = vpop.f32.mrf.mxu0
    %v947 = vadd.f32 0.0, %v946
    %948 = vmatmul.f32.gmra.mxu0 %v909
    %v949 = vpop.f32.mrf.mxu0
    %v950 = vadd.f32 0.0, %v949
    %951 = vdwg.mxu0
    %v952 = vmul.f32 %v792, %v929
    %v953 = vmul.f32 %v795, %v932
    %v954 = vadd.f32 %v952, %v953
    %v955 = vmul.f32 %v798, %v935
    %v956 = vadd.f32 %v954, %v955
    %v957 = vmul.f32 %v801, %v938
    %v958 = vadd.f32 %v956, %v957
    %v959 = vmul.f32 %v804, %v941
    %v960 = vadd.f32 %v958, %v959
    %v961 = vmul.f32 %v807, %v944
    %v962 = vadd.f32 %v960, %v961
    %v963 = vmul.f32 %v810, %v947
    %v964 = vadd.f32 %v962, %v963
    %v965 = vmul.f32 %v813, %v950
    %v966 = vadd.f32 %v964, %v965
    %v967 = vmax.f32 %v966, 1e-24
    %v968 = vrsqrt.pop %v967
    %v969 = vmul.f32 %v968, %v967
    %v970 = vmul.f32 %v969, %v968
    %v971 = vmul.f32 0.5, %v970
    %v972 = vsub.f32 1.5, %v971
    %v973 = vmul.f32 %v968, %v972
    %vm974 = vweird.f32 %v967
    %vm975 = vweird.f32 %v968
    %vm976 = vmor %vm974, %vm975
    %v977 = vsel %vm976, %v968, %v973
    %v978 = vmul.f32 %v828, %v977
    %v979 = vld [vmem:[#allocation11] sm:$0xff]
    %v980 = vld [vmem:[#allocation13] sm:$0xff]
    %v981 = vmul.f32 %v978, %v979
    %vm982 = vcmask 64512
    %v983 = vsel %vm982, %v981, 0.0
    %984 = vadd.xlane.f32.xlu0 %v983
    %v985 = vpop.xlane.xlu0 %984
    %v986 = vmul.f32 %v985, 14.285714
    %v988 = vsel %vm982, %v979, 0
    %v991 = vsel %vm982, %v978, 0
    %993 = vmatpush.xpose.msra.mxu0 0.0
    %994 = vmatpush.xpose.msra.mxu0 0.0
    %995 = vmatpush.xpose.msra.mxu0 0.0
    %996 = vmatpush.xpose.msra.mxu0 0.0
    %997 = vmatpush.xpose.msra.mxu0 0.0
    %998 = vmatpush.xpose.msra.mxu0 0.0
    %999 = vmatpush.xpose.msra.mxu0 0.0
    %1000 = vmatpush.xpose.msra.mxu0 0.0
    %1001 = vmatpush.xpose.msra.mxu0 0.0
    %1002 = vmatpush.xpose.msra.mxu0 0.0
    %1003 = vmatpush.xpose.msra.mxu0 0.0
    %1004 = vmatpush.xpose.msra.mxu0 0.0
    %1005 = vmatpush.xpose.msra.mxu0 0.0
    %1006 = vmatpush.xpose.msra.mxu0 0.0
    %1007 = vmatpush.xpose.msra.mxu0 0.0
    %1008 = vmatpush.xpose.msra.mxu0 %v991
    %1009 = vmatmul.f32.gmra.mxu0 %v988
    %v1010 = vpop.f32.mrf.mxu0
    %v1011 = vadd.f32 0.0, %v1010
    %1012 = vdwg.mxu0
    %vm1013 = vcmp.gt.f32.partialorder %v980, 0.5
    %v1014 = vmul.f32 %v1011, 14.285714
    %v1015 = vsel %vm1013, %v1014, -inf
    %v1016 = vsel %vm982, %v1015, -inf
    %1017 = vmax.xlane.f32.xlu0 %v1016
    %v1018 = vpop.xlane.xlu0 %1017
    %v1019 = vmax.f32 %v986, %v1018
    %v1020 = vsub.f32 %v986, %v1019
    %v1021 = vmul.f32 %v1020, 1.442695
    %v1022 = vpow.pop %v1021
    %v1023 = vsub.f32 %v1015, %v1019
    %v1024 = vmul.f32 %v1023, 1.442695
    %v1025 = vpow.pop %v1024
    %v1026 = vsel %vm982, %v1025, 0.0
    %1027 = vadd.xlane.f32.xlu0 %v1026
    %v1028 = vpop.xlane.xlu0 %1027
    %v1029 = vadd.f32 %v1022, %v1028
    %v1030 = vsub.f32 %v1019, %v986
    %v1031 = vlog2.pop %v1029
    %v1032 = vmul.f32 %v1031, 0.6931472
    %v1033 = vadd.f32 %v1030, %v1032
    %vm1034 = vcmask 7168
    %v1035 = vsel %vm1034, %v1033, 0.0
    %1036 = vadd.xlane.f32.xlu0 %v1035
    %v1037 = vpop.xlane.xlu0 %1036
    %v1038 = vrot.slane %v1037, 4
    %v1039 = vadd.f32 %v1037, %v1038
    %v1040 = vrot.slane %v1039, 2
    %v1041 = vadd.f32 %v1039, %v1040
    %v1042 = vrot.slane %v1041, 1
    %v1043 = vadd.f32 %v1041, %v1042
    %s1044 = vtos %v1043
    %s1045 = smul.f32 %s1044, 0.125
    %s1046 = scalar_lea.smem [#allocation14], 0
    %1047 = sst [smem:[%s1046]] %s1045
    // Predicated region
    $region58: #{tpu_custom_call.1} parent=1 // pred_check
      _
    $region59: #{tpu_custom_call.1} parent=1 // pred_check_branch
      %1049 = sbr.rel (0) target = $region61
    $region60: #{tpu_custom_call.1} parent=1 // pred_region
      %1051 = vsyncadd [#allocation4], 0
      %s1053 = sshll.u32 %s7, 4
      %s1054 = int_to_ptr.hbm [resolvable:$true] %s1053
      %1056 = dma.smem_to_hbm [#allocation14], 16, %s1054, [#allocation4]
    $region61: #{tpu_custom_call.1} parent=1 // pred_fallthru
      _
    // Predicated region
    $region62: #{tpu_custom_call.1} parent=1 // pred_check
      _
    $region63: #{tpu_custom_call.1} parent=1 // pred_check_branch
      %1058 = sbr.rel (0) target = $region65
    $region64: #{tpu_custom_call.1} parent=1 // pred_region
      %1060 = dma.done [#allocation4], 16
    $region65: #{tpu_custom_call.1} parent=1 // pred_fallthru
      _
    %1061 = sfence
    %1062 = vsyncpa [#allocation3], 1
    %1063 = vsyncpa [#allocation6], 1
    %1064 = vsyncpa [#allocation9], 1
    %1065 = vsyncpa [#allocation12], 1
    %1066 = vsyncpa [#allocation4], 1

</llo_original>
